<compile_context>
chip_gen: v7x
topology: tpu7x:2x2x1
jax: 0.10.0
libtpu: 0.0.40
codegen_flags: <defaults>
</compile_context>

<pallas_src>
import functools

import jax
import jax.numpy as jnp
from jax.experimental import pallas as pl
from jax.experimental.pallas import tpu as pltpu

LANE = 128      # vreg lane width
SUBLANE = 8     # f32 sublane count


# ----------------------------------------------------------------------------
# Kernel: one invocation computes the full GRU + head.
# ----------------------------------------------------------------------------
def _gru_kernel(x_ref,        # (T*Bp, Dp)   time-major, batch/lane zero-padded
                wih_ref,      # (Dp, 3*Hp)   fused [r|z|n] input weights (x @ W)
                whh_ref,      # (Hp, 3*Hp)   fused [r|z|n] recurrent weights
                bx_ref,       # (1, 3*Hp)    [b_ir+b_hr | b_iz+b_hz | b_in]
                bhn_ref,      # (1, Hp)      b_hn (must stay inside r*(...))
                wdiff_ref,    # (Hp, LANE)   col0 = w0-w1, col1 = w1-w0, rest 0
                bdiff_ref,    # (1, LANE)    col0 = b0-b1, col1 = b1-b0, rest 0
                out_ref,      # (Bp, LANE)   cols 0/1 = softmax probabilities
                xproj_ref,    # VMEM scratch (T*Bp, 3*Hp)
                *, seq_len, batch_pad, hid_pad):
    Bp, Hp = batch_pad, hid_pad

    # Input projection for ALL time steps in one MXU call -> off the serial path.
    xproj_ref[...] = (
        jnp.dot(x_ref[...], wih_ref[...], preferred_element_type=jnp.float32)
        + bx_ref[...])

    # Hoist weight / bias materialization out of the unrolled recurrence
    # (JAX does not CSE broadcast_in_dim).
    whh = whh_ref[...]                                        # (Hp, 3Hp)
    bhn = jnp.broadcast_to(bhn_ref[...], (Bp, Hp))            # (Bp, Hp)

    h = jnp.zeros((Bp, Hp), jnp.float32)                      # h_0 = 0 (hx=None)
    for t in range(seq_len):                                  # fully unrolled, static slices
        xp = xproj_ref[t * Bp:(t + 1) * Bp, :]                # (Bp, 3Hp) 8-aligned rows
        hp = jnp.dot(h, whh, preferred_element_type=jnp.float32)   # (Bp, 3Hp)
        # PyTorch gate order r, z, n; 128-lane-aligned static slices.
        r = jax.nn.sigmoid(xp[:, 0:Hp] + hp[:, 0:Hp])
        z = jax.nn.sigmoid(xp[:, Hp:2 * Hp] + hp[:, Hp:2 * Hp])
        n = jnp.tanh(xp[:, 2 * Hp:3 * Hp] + r * (hp[:, 2 * Hp:3 * Hp] + bhn))
        h = (1.0 - z) * n + z * h

    # 2-class softmax == sigmoid of the logit difference (exact):
    #   lane0: sigmoid(l0 - l1) = p0,  lane1: sigmoid(l1 - l0) = p1.
    d = (jnp.dot(h, wdiff_ref[...], preferred_element_type=jnp.float32)
         + bdiff_ref[...])                                    # (Bp, LANE)
    p = jax.nn.sigmoid(d)
    lane = jax.lax.broadcasted_iota(jnp.int32, p.shape, 1)
    out_ref[...] = jnp.where(lane < 2, p, 0.0)


# ----------------------------------------------------------------------------
# Wrapper: fuse / pad parameters, lay out input, call the kernel.
# ----------------------------------------------------------------------------
def _pad_to(a, rows, cols):
    return jnp.pad(a, ((0, rows - a.shape[0]), (0, cols - a.shape[1])))


@jax.jit
def gru_forward(x, params):
    """x: (B, T, D) float32 (batch_first, like PyTorch). Returns (B, 2) probs."""
    B, T, D = x.shape
    H = params["wir"].shape[1]

    Bp = ((B + SUBLANE - 1) // SUBLANE) * SUBLANE
    Dp = ((D + LANE - 1) // LANE) * LANE
    Hp = ((H + LANE - 1) // LANE) * LANE

    # ---- fuse + zero-pad GRU parameters (padded rows/cols are exact zeros) ---
    wih = jnp.concatenate([_pad_to(params["wir"], Dp, Hp),
                           _pad_to(params["wiz"], Dp, Hp),
                           _pad_to(params["win"], Dp, Hp)], axis=1)   # (Dp, 3Hp)
    whh = jnp.concatenate([_pad_to(params["whr"], Hp, Hp),
                           _pad_to(params["whz"], Hp, Hp),
                           _pad_to(params["whn"], Hp, Hp)], axis=1)   # (Hp, 3Hp)
    bx = jnp.concatenate([_pad_to(params["br"], 1, Hp),
                          _pad_to(params["bz"], 1, Hp),
                          _pad_to(params["bin"], 1, Hp)], axis=1)     # (1, 3Hp)
    bhn = _pad_to(params["bhn"], 1, Hp)                               # (1, Hp)

    # ---- head: antisymmetrized logit-difference weights for 2-class softmax --
    wout, bout = params["wout"], params["bout"]                       # (H,2),(1,2)
    wdiff = jnp.stack([wout[:, 0] - wout[:, 1],
                       wout[:, 1] - wout[:, 0]], axis=1)              # (H, 2)
    bdiff = jnp.stack([bout[:, 0] - bout[:, 1],
                       bout[:, 1] - bout[:, 0]], axis=1)              # (1, 2)
    wdiff = _pad_to(wdiff, Hp, LANE)                                  # (Hp, 128)
    bdiff = _pad_to(bdiff, 1, LANE)                                   # (1, 128)

    # ---- input: (B,T,D) -> time-major, batch->8 sublanes, D->128 lanes -------
    x_tbd = jnp.transpose(x, (1, 0, 2))                               # (T, B, D)
    x_tbd = jnp.pad(x_tbd, ((0, 0), (0, Bp - B), (0, Dp - D)))        # (T, Bp, Dp)
    x_flat = x_tbd.reshape(T * Bp, Dp)

    kernel = functools.partial(_gru_kernel, seq_len=T, batch_pad=Bp, hid_pad=Hp)

    full = lambda shape: pl.BlockSpec(shape, lambda i: (0,) * len(shape))
    grid_spec = pltpu.PrefetchScalarGridSpec(
        num_scalar_prefetch=0,
        grid=(1,),                         # single invocation; recurrence is in-kernel
        in_specs=[full((T * Bp, Dp)),
                  full((Dp, 3 * Hp)), full((Hp, 3 * Hp)),
                  full((1, 3 * Hp)), full((1, Hp)),
                  full((Hp, LANE)), full((1, LANE))],
        out_specs=full((Bp, LANE)),
        scratch_shapes=[pltpu.VMEM((T * Bp, 3 * Hp), jnp.float32)],
    )

    out_pad = pl.pallas_call(
        kernel,
        out_shape=jax.ShapeDtypeStruct((Bp, LANE), jnp.float32),
        grid_spec=grid_spec,
        compiler_params=pltpu.CompilerParams(
            dimension_semantics=("arbitrary",)),
    )(x_flat, wih, whh, bx, bhn, wdiff, bdiff)

    return out_pad[:B, :2]


# ----------------------------------------------------------------------------
# Deterministic parameter init (PyTorch-style U(-1/sqrt(H), 1/sqrt(H))).
# ----------------------------------------------------------------------------
def init_params(key, input_size, hid_size):
    k = 1.0 / jnp.sqrt(jnp.float32(hid_size))
    keys = jax.random.split(key, 14)
    u = lambda kk, shape: jax.random.uniform(kk, shape, jnp.float32, -k, k)

    # GRU weights (stored transposed vs. PyTorch: x @ W form).
    wir, wiz, win = (u(keys[i], (input_size, hid_size)) for i in range(3))
    whr, whz, whn = (u(keys[3 + i], (hid_size, hid_size)) for i in range(3))
    b_ir, b_iz, b_in = (u(keys[6 + i], (1, hid_size)) for i in range(3))
    b_hr, b_hz, b_hn = (u(keys[9 + i], (1, hid_size)) for i in range(3))
    # Linear head.
    wout = u(keys[12], (hid_size, 2))
    bout = u(keys[13], (1, 2))

    return dict(
        wir=wir, wiz=wiz, win=win,
        whr=whr, whz=whz, whn=whn,
        br=b_ir + b_hr, bz=b_iz + b_hz,   # r,z biases can be pre-summed
        bin=b_in, bhn=b_hn,               # n-gate biases must stay separate
        wout=wout, bout=bout,
    )


# ----------------------------------------------------------------------------
# Pure-JAX reference (mirrors torch.nn.GRU + Linear + Softmax(1)).
# ----------------------------------------------------------------------------
def gru_ref(x, p):
    B, T, D = x.shape
    H = p["wir"].shape[1]

    def step(h, x_t):
        r = jax.nn.sigmoid(x_t @ p["wir"] + h @ p["whr"] + p["br"][0])
        z = jax.nn.sigmoid(x_t @ p["wiz"] + h @ p["whz"] + p["bz"][0])
        n = jnp.tanh(x_t @ p["win"] + p["bin"][0]
                     + r * (h @ p["whn"] + p["bhn"][0]))
        return (1.0 - z) * n + z * h, None

    h0 = jnp.zeros((B, H), jnp.float32)
    hT, _ = jax.lax.scan(step, h0, jnp.transpose(x, (1, 0, 2)))
    logits = hT @ p["wout"] + p["bout"][0]
    return jax.nn.softmax(logits, axis=1)


if __name__ == "__main__":
    B, T, D, H = 2, 8, 50, 32   # input_size=50 fixed by the module; hid_size=32

    key = jax.random.PRNGKey(0)
    k_x, k_p = jax.random.split(key)
    x = jax.random.normal(k_x, (B, T, D), jnp.float32)
    params = init_params(k_p, D, H)

    out = gru_forward(x, params)
    out = jax.block_until_ready(out)

    ref = gru_ref(x, params)
    assert out.shape == (B, 2)
    assert jnp.allclose(out, ref, atol=1e-5, rtol=1e-5), (out, ref)

    print("KERNEL_OK")
</pallas_src>

<mosaic_0001>
module attributes {stable_mosaic.version = 11 : i64} {
  func.func @_gru_kernel(%arg0: i32, %arg1: memref<64x128xf32, #tpu.memory_space<vmem>>, %arg2: memref<128x384xf32, #tpu.memory_space<vmem>>, %arg3: memref<128x384xf32, #tpu.memory_space<vmem>>, %arg4: memref<1x384xf32, #tpu.memory_space<vmem>>, %arg5: memref<1x128xf32, #tpu.memory_space<vmem>>, %arg6: memref<128x128xf32, #tpu.memory_space<vmem>>, %arg7: memref<1x128xf32, #tpu.memory_space<vmem>>, %arg8: memref<8x128xf32, #tpu.memory_space<vmem>>, %arg9: memref<64x384xf32, #tpu.memory_space<vmem>>) attributes {dimension_semantics = [#tpu.dimension_semantics<arbitrary>], iteration_bounds = array<i64: 1>, scalar_prefetch = 0 : i64, scratch_operands = 1 : i64, tpu.core_type = #tpu.core_type<tc>, window_params = [{pipeline_mode = #tpu.pipeline_mode<synchronous>, transform_indices = @transform_0, window_bounds = array<i64: 64, 128>}, {pipeline_mode = #tpu.pipeline_mode<synchronous>, transform_indices = @transform_1, window_bounds = array<i64: 128, 384>}, {pipeline_mode = #tpu.pipeline_mode<synchronous>, transform_indices = @transform_2, window_bounds = array<i64: 128, 384>}, {pipeline_mode = #tpu.pipeline_mode<synchronous>, transform_indices = @transform_3, window_bounds = array<i64: 1, 384>}, {pipeline_mode = #tpu.pipeline_mode<synchronous>, transform_indices = @transform_4, window_bounds = array<i64: 1, 128>}, {pipeline_mode = #tpu.pipeline_mode<synchronous>, transform_indices = @transform_5, window_bounds = array<i64: 128, 128>}, {pipeline_mode = #tpu.pipeline_mode<synchronous>, transform_indices = @transform_6, window_bounds = array<i64: 1, 128>}, {pipeline_mode = #tpu.pipeline_mode<synchronous>, transform_indices = @transform_7, window_bounds = array<i64: 8, 128>}]} {
    %c0 = arith.constant 0 : index
    %c0_0 = arith.constant 0 : index
    %0 = vector.load %arg1[%c0, %c0_0] : memref<64x128xf32, #tpu.memory_space<vmem>>, vector<64x128xf32>
    %c0_1 = arith.constant 0 : index
    %c0_2 = arith.constant 0 : index
    %1 = vector.load %arg2[%c0_1, %c0_2] : memref<128x384xf32, #tpu.memory_space<vmem>>, vector<128x384xf32>
    %cst = arith.constant dense<0.000000e+00> : vector<64x384xf32>
    %2 = tpu.matmul %0, %1, %cst {dimension_numbers = #tpu.dot_dimension_numbers<[1], [0], [0], [1], [0, 0, 1, 1], [], []>} : vector<64x128xf32>, vector<128x384xf32>, vector<64x384xf32> -> vector<64x384xf32>
    %c0_3 = arith.constant 0 : index
    %c0_4 = arith.constant 0 : index
    %3 = vector.load %arg4[%c0_3, %c0_4] : memref<1x384xf32, #tpu.memory_space<vmem>>, vector<1x384xf32>
    %4 = vector.broadcast %3 : vector<1x384xf32> to vector<64x384xf32>
    %5 = arith.addf %2, %4 : vector<64x384xf32>
    %c0_5 = arith.constant 0 : index
    %c0_6 = arith.constant 0 : index
    %6 = vector.load %arg9[%c0_5, %c0_6] : memref<64x384xf32, #tpu.memory_space<vmem>>, vector<64x384xf32>
    tpu.vector_store %arg9[%c0_5, %c0_6], %5 {strides = array<i32>} : memref<64x384xf32, #tpu.memory_space<vmem>>, vector<64x384xf32>,
    %c0_7 = arith.constant 0 : index
    %c0_8 = arith.constant 0 : index
    %7 = vector.load %arg3[%c0_7, %c0_8] : memref<128x384xf32, #tpu.memory_space<vmem>>, vector<128x384xf32>
    %c0_9 = arith.constant 0 : index
    %c0_10 = arith.constant 0 : index
    %8 = vector.load %arg5[%c0_9, %c0_10] : memref<1x128xf32, #tpu.memory_space<vmem>>, vector<1x128xf32>
    %9 = vector.shape_cast %8 : vector<1x128xf32> to vector<1x128xf32>
    %10 = vector.broadcast %9 : vector<1x128xf32> to vector<8x128xf32>
    %cst_11 = arith.constant 0.000000e+00 : f32
    %11 = vector.broadcast %cst_11 : f32 to vector<8x128xf32>
    %c0_12 = arith.constant 0 : index
    %c0_13 = arith.constant 0 : index
    %12 = vector.load %arg9[%c0_12, %c0_13] : memref<64x384xf32, #tpu.memory_space<vmem>>, vector<8x384xf32>
    %cst_14 = arith.constant dense<0.000000e+00> : vector<8x384xf32>
    %13 = tpu.matmul %11, %7, %cst_14 {dimension_numbers = #tpu.dot_dimension_numbers<[1], [0], [0], [1], [0, 0, 1, 1], [], []>} : vector<8x128xf32>, vector<128x384xf32>, vector<8x384xf32> -> vector<8x384xf32>
    %14 = vector.extract_strided_slice %12 {offsets = [0, 0], sizes = [8, 128], strides = [1, 1]} : vector<8x384xf32> to vector<8x128xf32>
    %15 = vector.extract_strided_slice %13 {offsets = [0, 0], sizes = [8, 128], strides = [1, 1]} : vector<8x384xf32> to vector<8x128xf32>
    %16 = arith.addf %14, %15 : vector<8x128xf32>
    %17 = arith.negf %16 : vector<8x128xf32>
    %18 = math.exp %17 : vector<8x128xf32>
    %cst_15 = arith.constant 1.000000e+00 : f32
    %19 = vector.broadcast %cst_15 : f32 to vector<8x128xf32>
    %20 = arith.addf %19, %18 : vector<8x128xf32>
    %21 = arith.divf %19, %20 : vector<8x128xf32>
    %22 = vector.extract_strided_slice %12 {offsets = [0, 128], sizes = [8, 128], strides = [1, 1]} : vector<8x384xf32> to vector<8x128xf32>
    %23 = vector.extract_strided_slice %13 {offsets = [0, 128], sizes = [8, 128], strides = [1, 1]} : vector<8x384xf32> to vector<8x128xf32>
    %24 = arith.addf %22, %23 : vector<8x128xf32>
    %25 = arith.negf %24 : vector<8x128xf32>
    %26 = math.exp %25 : vector<8x128xf32>
    %cst_16 = arith.constant 1.000000e+00 : f32
    %27 = vector.broadcast %cst_16 : f32 to vector<8x128xf32>
    %28 = arith.addf %27, %26 : vector<8x128xf32>
    %29 = arith.divf %27, %28 : vector<8x128xf32>
    %30 = vector.extract_strided_slice %12 {offsets = [0, 256], sizes = [8, 128], strides = [1, 1]} : vector<8x384xf32> to vector<8x128xf32>
    %31 = vector.extract_strided_slice %13 {offsets = [0, 256], sizes = [8, 128], strides = [1, 1]} : vector<8x384xf32> to vector<8x128xf32>
    %32 = arith.addf %31, %10 : vector<8x128xf32>
    %33 = arith.mulf %21, %32 : vector<8x128xf32>
    %34 = arith.addf %30, %33 : vector<8x128xf32>
    %35 = math.tanh %34 : vector<8x128xf32>
    %cst_17 = arith.constant 1.000000e+00 : f32
    %36 = vector.broadcast %cst_17 : f32 to vector<8x128xf32>
    %37 = arith.subf %36, %29 : vector<8x128xf32>
    %38 = arith.mulf %37, %35 : vector<8x128xf32>
    %39 = arith.mulf %29, %11 : vector<8x128xf32>
    %40 = arith.addf %38, %39 : vector<8x128xf32>
    %c8 = arith.constant 8 : index
    %c0_18 = arith.constant 0 : index
    %41 = vector.load %arg9[%c8, %c0_18] : memref<64x384xf32, #tpu.memory_space<vmem>>, vector<8x384xf32>
    %cst_19 = arith.constant dense<0.000000e+00> : vector<8x384xf32>
    %42 = tpu.matmul %40, %7, %cst_19 {dimension_numbers = #tpu.dot_dimension_numbers<[1], [0], [0], [1], [0, 0, 1, 1], [], []>} : vector<8x128xf32>, vector<128x384xf32>, vector<8x384xf32> -> vector<8x384xf32>
    %43 = vector.extract_strided_slice %41 {offsets = [0, 0], sizes = [8, 128], strides = [1, 1]} : vector<8x384xf32> to vector<8x128xf32>
    %44 = vector.extract_strided_slice %42 {offsets = [0, 0], sizes = [8, 128], strides = [1, 1]} : vector<8x384xf32> to vector<8x128xf32>
    %45 = arith.addf %43, %44 : vector<8x128xf32>
    %46 = arith.negf %45 : vector<8x128xf32>
    %47 = math.exp %46 : vector<8x128xf32>
    %cst_20 = arith.constant 1.000000e+00 : f32
    %48 = vector.broadcast %cst_20 : f32 to vector<8x128xf32>
    %49 = arith.addf %48, %47 : vector<8x128xf32>
    %50 = arith.divf %48, %49 : vector<8x128xf32>
    %51 = vector.extract_strided_slice %41 {offsets = [0, 128], sizes = [8, 128], strides = [1, 1]} : vector<8x384xf32> to vector<8x128xf32>
    %52 = vector.extract_strided_slice %42 {offsets = [0, 128], sizes = [8, 128], strides = [1, 1]} : vector<8x384xf32> to vector<8x128xf32>
    %53 = arith.addf %51, %52 : vector<8x128xf32>
    %54 = arith.negf %53 : vector<8x128xf32>
    %55 = math.exp %54 : vector<8x128xf32>
    %cst_21 = arith.constant 1.000000e+00 : f32
    %56 = vector.broadcast %cst_21 : f32 to vector<8x128xf32>
    %57 = arith.addf %56, %55 : vector<8x128xf32>
    %58 = arith.divf %56, %57 : vector<8x128xf32>
    %59 = vector.extract_strided_slice %41 {offsets = [0, 256], sizes = [8, 128], strides = [1, 1]} : vector<8x384xf32> to vector<8x128xf32>
    %60 = vector.extract_strided_slice %42 {offsets = [0, 256], sizes = [8, 128], strides = [1, 1]} : vector<8x384xf32> to vector<8x128xf32>
    %61 = arith.addf %60, %10 : vector<8x128xf32>
    %62 = arith.mulf %50, %61 : vector<8x128xf32>
    %63 = arith.addf %59, %62 : vector<8x128xf32>
    %64 = math.tanh %63 : vector<8x128xf32>
    %cst_22 = arith.constant 1.000000e+00 : f32
    %65 = vector.broadcast %cst_22 : f32 to vector<8x128xf32>
    %66 = arith.subf %65, %58 : vector<8x128xf32>
    %67 = arith.mulf %66, %64 : vector<8x128xf32>
    %68 = arith.mulf %58, %40 : vector<8x128xf32>
    %69 = arith.addf %67, %68 : vector<8x128xf32>
    %c16 = arith.constant 16 : index
    %c0_23 = arith.constant 0 : index
    %70 = vector.load %arg9[%c16, %c0_23] : memref<64x384xf32, #tpu.memory_space<vmem>>, vector<8x384xf32>
    %cst_24 = arith.constant dense<0.000000e+00> : vector<8x384xf32>
    %71 = tpu.matmul %69, %7, %cst_24 {dimension_numbers = #tpu.dot_dimension_numbers<[1], [0], [0], [1], [0, 0, 1, 1], [], []>} : vector<8x128xf32>, vector<128x384xf32>, vector<8x384xf32> -> vector<8x384xf32>
    %72 = vector.extract_strided_slice %70 {offsets = [0, 0], sizes = [8, 128], strides = [1, 1]} : vector<8x384xf32> to vector<8x128xf32>
    %73 = vector.extract_strided_slice %71 {offsets = [0, 0], sizes = [8, 128], strides = [1, 1]} : vector<8x384xf32> to vector<8x128xf32>
    %74 = arith.addf %72, %73 : vector<8x128xf32>
    %75 = arith.negf %74 : vector<8x128xf32>
    %76 = math.exp %75 : vector<8x128xf32>
    %cst_25 = arith.constant 1.000000e+00 : f32
    %77 = vector.broadcast %cst_25 : f32 to vector<8x128xf32>
    %78 = arith.addf %77, %76 : vector<8x128xf32>
    %79 = arith.divf %77, %78 : vector<8x128xf32>
    %80 = vector.extract_strided_slice %70 {offsets = [0, 128], sizes = [8, 128], strides = [1, 1]} : vector<8x384xf32> to vector<8x128xf32>
    %81 = vector.extract_strided_slice %71 {offsets = [0, 128], sizes = [8, 128], strides = [1, 1]} : vector<8x384xf32> to vector<8x128xf32>
    %82 = arith.addf %80, %81 : vector<8x128xf32>
    %83 = arith.negf %82 : vector<8x128xf32>
    %84 = math.exp %83 : vector<8x128xf32>
    %cst_26 = arith.constant 1.000000e+00 : f32
    %85 = vector.broadcast %cst_26 : f32 to vector<8x128xf32>
    %86 = arith.addf %85, %84 : vector<8x128xf32>
    %87 = arith.divf %85, %86 : vector<8x128xf32>
    %88 = vector.extract_strided_slice %70 {offsets = [0, 256], sizes = [8, 128], strides = [1, 1]} : vector<8x384xf32> to vector<8x128xf32>
    %89 = vector.extract_strided_slice %71 {offsets = [0, 256], sizes = [8, 128], strides = [1, 1]} : vector<8x384xf32> to vector<8x128xf32>
    %90 = arith.addf %89, %10 : vector<8x128xf32>
    %91 = arith.mulf %79, %90 : vector<8x128xf32>
    %92 = arith.addf %88, %91 : vector<8x128xf32>
    %93 = math.tanh %92 : vector<8x128xf32>
    %cst_27 = arith.constant 1.000000e+00 : f32
    %94 = vector.broadcast %cst_27 : f32 to vector<8x128xf32>
    %95 = arith.subf %94, %87 : vector<8x128xf32>
    %96 = arith.mulf %95, %93 : vector<8x128xf32>
    %97 = arith.mulf %87, %69 : vector<8x128xf32>
    %98 = arith.addf %96, %97 : vector<8x128xf32>
    %c24 = arith.constant 24 : index
    %c0_28 = arith.constant 0 : index
    %99 = vector.load %arg9[%c24, %c0_28] : memref<64x384xf32, #tpu.memory_space<vmem>>, vector<8x384xf32>
    %cst_29 = arith.constant dense<0.000000e+00> : vector<8x384xf32>
    %100 = tpu.matmul %98, %7, %cst_29 {dimension_numbers = #tpu.dot_dimension_numbers<[1], [0], [0], [1], [0, 0, 1, 1], [], []>} : vector<8x128xf32>, vector<128x384xf32>, vector<8x384xf32> -> vector<8x384xf32>
    %101 = vector.extract_strided_slice %99 {offsets = [0, 0], sizes = [8, 128], strides = [1, 1]} : vector<8x384xf32> to vector<8x128xf32>
    %102 = vector.extract_strided_slice %100 {offsets = [0, 0], sizes = [8, 128], strides = [1, 1]} : vector<8x384xf32> to vector<8x128xf32>
    %103 = arith.addf %101, %102 : vector<8x128xf32>
    %104 = arith.negf %103 : vector<8x128xf32>
    %105 = math.exp %104 : vector<8x128xf32>
    %cst_30 = arith.constant 1.000000e+00 : f32
    %106 = vector.broadcast %cst_30 : f32 to vector<8x128xf32>
    %107 = arith.addf %106, %105 : vector<8x128xf32>
    %108 = arith.divf %106, %107 : vector<8x128xf32>
    %109 = vector.extract_strided_slice %99 {offsets = [0, 128], sizes = [8, 128], strides = [1, 1]} : vector<8x384xf32> to vector<8x128xf32>
    %110 = vector.extract_strided_slice %100 {offsets = [0, 128], sizes = [8, 128], strides = [1, 1]} : vector<8x384xf32> to vector<8x128xf32>
    %111 = arith.addf %109, %110 : vector<8x128xf32>
    %112 = arith.negf %111 : vector<8x128xf32>
    %113 = math.exp %112 : vector<8x128xf32>
    %cst_31 = arith.constant 1.000000e+00 : f32
    %114 = vector.broadcast %cst_31 : f32 to vector<8x128xf32>
    %115 = arith.addf %114, %113 : vector<8x128xf32>
    %116 = arith.divf %114, %115 : vector<8x128xf32>
    %117 = vector.extract_strided_slice %99 {offsets = [0, 256], sizes = [8, 128], strides = [1, 1]} : vector<8x384xf32> to vector<8x128xf32>
    %118 = vector.extract_strided_slice %100 {offsets = [0, 256], sizes = [8, 128], strides = [1, 1]} : vector<8x384xf32> to vector<8x128xf32>
    %119 = arith.addf %118, %10 : vector<8x128xf32>
    %120 = arith.mulf %108, %119 : vector<8x128xf32>
    %121 = arith.addf %117, %120 : vector<8x128xf32>
    %122 = math.tanh %121 : vector<8x128xf32>
    %cst_32 = arith.constant 1.000000e+00 : f32
    %123 = vector.broadcast %cst_32 : f32 to vector<8x128xf32>
    %124 = arith.subf %123, %116 : vector<8x128xf32>
    %125 = arith.mulf %124, %122 : vector<8x128xf32>
    %126 = arith.mulf %116, %98 : vector<8x128xf32>
    %127 = arith.addf %125, %126 : vector<8x128xf32>
    %c32 = arith.constant 32 : index
    %c0_33 = arith.constant 0 : index
    %128 = vector.load %arg9[%c32, %c0_33] : memref<64x384xf32, #tpu.memory_space<vmem>>, vector<8x384xf32>
    %cst_34 = arith.constant dense<0.000000e+00> : vector<8x384xf32>
    %129 = tpu.matmul %127, %7, %cst_34 {dimension_numbers = #tpu.dot_dimension_numbers<[1], [0], [0], [1], [0, 0, 1, 1], [], []>} : vector<8x128xf32>, vector<128x384xf32>, vector<8x384xf32> -> vector<8x384xf32>
    %130 = vector.extract_strided_slice %128 {offsets = [0, 0], sizes = [8, 128], strides = [1, 1]} : vector<8x384xf32> to vector<8x128xf32>
    %131 = vector.extract_strided_slice %129 {offsets = [0, 0], sizes = [8, 128], strides = [1, 1]} : vector<8x384xf32> to vector<8x128xf32>
    %132 = arith.addf %130, %131 : vector<8x128xf32>
    %133 = arith.negf %132 : vector<8x128xf32>
    %134 = math.exp %133 : vector<8x128xf32>
    %cst_35 = arith.constant 1.000000e+00 : f32
    %135 = vector.broadcast %cst_35 : f32 to vector<8x128xf32>
    %136 = arith.addf %135, %134 : vector<8x128xf32>
    %137 = arith.divf %135, %136 : vector<8x128xf32>
    %138 = vector.extract_strided_slice %128 {offsets = [0, 128], sizes = [8, 128], strides = [1, 1]} : vector<8x384xf32> to vector<8x128xf32>
    %139 = vector.extract_strided_slice %129 {offsets = [0, 128], sizes = [8, 128], strides = [1, 1]} : vector<8x384xf32> to vector<8x128xf32>
    %140 = arith.addf %138, %139 : vector<8x128xf32>
    %141 = arith.negf %140 : vector<8x128xf32>
    %142 = math.exp %141 : vector<8x128xf32>
    %cst_36 = arith.constant 1.000000e+00 : f32
    %143 = vector.broadcast %cst_36 : f32 to vector<8x128xf32>
    %144 = arith.addf %143, %142 : vector<8x128xf32>
    %145 = arith.divf %143, %144 : vector<8x128xf32>
    %146 = vector.extract_strided_slice %128 {offsets = [0, 256], sizes = [8, 128], strides = [1, 1]} : vector<8x384xf32> to vector<8x128xf32>
    %147 = vector.extract_strided_slice %129 {offsets = [0, 256], sizes = [8, 128], strides = [1, 1]} : vector<8x384xf32> to vector<8x128xf32>
    %148 = arith.addf %147, %10 : vector<8x128xf32>
    %149 = arith.mulf %137, %148 : vector<8x128xf32>
    %150 = arith.addf %146, %149 : vector<8x128xf32>
    %151 = math.tanh %150 : vector<8x128xf32>
    %cst_37 = arith.constant 1.000000e+00 : f32
    %152 = vector.broadcast %cst_37 : f32 to vector<8x128xf32>
    %153 = arith.subf %152, %145 : vector<8x128xf32>
    %154 = arith.mulf %153, %151 : vector<8x128xf32>
    %155 = arith.mulf %145, %127 : vector<8x128xf32>
    %156 = arith.addf %154, %155 : vector<8x128xf32>
    %c40 = arith.constant 40 : index
    %c0_38 = arith.constant 0 : index
    %157 = vector.load %arg9[%c40, %c0_38] : memref<64x384xf32, #tpu.memory_space<vmem>>, vector<8x384xf32>
    %cst_39 = arith.constant dense<0.000000e+00> : vector<8x384xf32>
    %158 = tpu.matmul %156, %7, %cst_39 {dimension_numbers = #tpu.dot_dimension_numbers<[1], [0], [0], [1], [0, 0, 1, 1], [], []>} : vector<8x128xf32>, vector<128x384xf32>, vector<8x384xf32> -> vector<8x384xf32>
    %159 = vector.extract_strided_slice %157 {offsets = [0, 0], sizes = [8, 128], strides = [1, 1]} : vector<8x384xf32> to vector<8x128xf32>
    %160 = vector.extract_strided_slice %158 {offsets = [0, 0], sizes = [8, 128], strides = [1, 1]} : vector<8x384xf32> to vector<8x128xf32>
    %161 = arith.addf %159, %160 : vector<8x128xf32>
    %162 = arith.negf %161 : vector<8x128xf32>
    %163 = math.exp %162 : vector<8x128xf32>
    %cst_40 = arith.constant 1.000000e+00 : f32
    %164 = vector.broadcast %cst_40 : f32 to vector<8x128xf32>
    %165 = arith.addf %164, %163 : vector<8x128xf32>
    %166 = arith.divf %164, %165 : vector<8x128xf32>
    %167 = vector.extract_strided_slice %157 {offsets = [0, 128], sizes = [8, 128], strides = [1, 1]} : vector<8x384xf32> to vector<8x128xf32>
    %168 = vector.extract_strided_slice %158 {offsets = [0, 128], sizes = [8, 128], strides = [1, 1]} : vector<8x384xf32> to vector<8x128xf32>
    %169 = arith.addf %167, %168 : vector<8x128xf32>
    %170 = arith.negf %169 : vector<8x128xf32>
    %171 = math.exp %170 : vector<8x128xf32>
    %cst_41 = arith.constant 1.000000e+00 : f32
    %172 = vector.broadcast %cst_41 : f32 to vector<8x128xf32>
    %173 = arith.addf %172, %171 : vector<8x128xf32>
    %174 = arith.divf %172, %173 : vector<8x128xf32>
    %175 = vector.extract_strided_slice %157 {offsets = [0, 256], sizes = [8, 128], strides = [1, 1]} : vector<8x384xf32> to vector<8x128xf32>
    %176 = vector.extract_strided_slice %158 {offsets = [0, 256], sizes = [8, 128], strides = [1, 1]} : vector<8x384xf32> to vector<8x128xf32>
    %177 = arith.addf %176, %10 : vector<8x128xf32>
    %178 = arith.mulf %166, %177 : vector<8x128xf32>
    %179 = arith.addf %175, %178 : vector<8x128xf32>
    %180 = math.tanh %179 : vector<8x128xf32>
    %cst_42 = arith.constant 1.000000e+00 : f32
    %181 = vector.broadcast %cst_42 : f32 to vector<8x128xf32>
    %182 = arith.subf %181, %174 : vector<8x128xf32>
    %183 = arith.mulf %182, %180 : vector<8x128xf32>
    %184 = arith.mulf %174, %156 : vector<8x128xf32>
    %185 = arith.addf %183, %184 : vector<8x128xf32>
    %c48 = arith.constant 48 : index
    %c0_43 = arith.constant 0 : index
    %186 = vector.load %arg9[%c48, %c0_43] : memref<64x384xf32, #tpu.memory_space<vmem>>, vector<8x384xf32>
    %cst_44 = arith.constant dense<0.000000e+00> : vector<8x384xf32>
    %187 = tpu.matmul %185, %7, %cst_44 {dimension_numbers = #tpu.dot_dimension_numbers<[1], [0], [0], [1], [0, 0, 1, 1], [], []>} : vector<8x128xf32>, vector<128x384xf32>, vector<8x384xf32> -> vector<8x384xf32>
    %188 = vector.extract_strided_slice %186 {offsets = [0, 0], sizes = [8, 128], strides = [1, 1]} : vector<8x384xf32> to vector<8x128xf32>
    %189 = vector.extract_strided_slice %187 {offsets = [0, 0], sizes = [8, 128], strides = [1, 1]} : vector<8x384xf32> to vector<8x128xf32>
    %190 = arith.addf %188, %189 : vector<8x128xf32>
    %191 = arith.negf %190 : vector<8x128xf32>
    %192 = math.exp %191 : vector<8x128xf32>
    %cst_45 = arith.constant 1.000000e+00 : f32
    %193 = vector.broadcast %cst_45 : f32 to vector<8x128xf32>
    %194 = arith.addf %193, %192 : vector<8x128xf32>
    %195 = arith.divf %193, %194 : vector<8x128xf32>
    %196 = vector.extract_strided_slice %186 {offsets = [0, 128], sizes = [8, 128], strides = [1, 1]} : vector<8x384xf32> to vector<8x128xf32>
    %197 = vector.extract_strided_slice %187 {offsets = [0, 128], sizes = [8, 128], strides = [1, 1]} : vector<8x384xf32> to vector<8x128xf32>
    %198 = arith.addf %196, %197 : vector<8x128xf32>
    %199 = arith.negf %198 : vector<8x128xf32>
    %200 = math.exp %199 : vector<8x128xf32>
    %cst_46 = arith.constant 1.000000e+00 : f32
    %201 = vector.broadcast %cst_46 : f32 to vector<8x128xf32>
    %202 = arith.addf %201, %200 : vector<8x128xf32>
    %203 = arith.divf %201, %202 : vector<8x128xf32>
    %204 = vector.extract_strided_slice %186 {offsets = [0, 256], sizes = [8, 128], strides = [1, 1]} : vector<8x384xf32> to vector<8x128xf32>
    %205 = vector.extract_strided_slice %187 {offsets = [0, 256], sizes = [8, 128], strides = [1, 1]} : vector<8x384xf32> to vector<8x128xf32>
    %206 = arith.addf %205, %10 : vector<8x128xf32>
    %207 = arith.mulf %195, %206 : vector<8x128xf32>
    %208 = arith.addf %204, %207 : vector<8x128xf32>
    %209 = math.tanh %208 : vector<8x128xf32>
    %cst_47 = arith.constant 1.000000e+00 : f32
    %210 = vector.broadcast %cst_47 : f32 to vector<8x128xf32>
    %211 = arith.subf %210, %203 : vector<8x128xf32>
    %212 = arith.mulf %211, %209 : vector<8x128xf32>
    %213 = arith.mulf %203, %185 : vector<8x128xf32>
    %214 = arith.addf %212, %213 : vector<8x128xf32>
    %c56 = arith.constant 56 : index
    %c0_48 = arith.constant 0 : index
    %215 = vector.load %arg9[%c56, %c0_48] : memref<64x384xf32, #tpu.memory_space<vmem>>, vector<8x384xf32>
    %cst_49 = arith.constant dense<0.000000e+00> : vector<8x384xf32>
    %216 = tpu.matmul %214, %7, %cst_49 {dimension_numbers = #tpu.dot_dimension_numbers<[1], [0], [0], [1], [0, 0, 1, 1], [], []>} : vector<8x128xf32>, vector<128x384xf32>, vector<8x384xf32> -> vector<8x384xf32>
    %217 = vector.extract_strided_slice %215 {offsets = [0, 0], sizes = [8, 128], strides = [1, 1]} : vector<8x384xf32> to vector<8x128xf32>
    %218 = vector.extract_strided_slice %216 {offsets = [0, 0], sizes = [8, 128], strides = [1, 1]} : vector<8x384xf32> to vector<8x128xf32>
    %219 = arith.addf %217, %218 : vector<8x128xf32>
    %220 = arith.negf %219 : vector<8x128xf32>
    %221 = math.exp %220 : vector<8x128xf32>
    %cst_50 = arith.constant 1.000000e+00 : f32
    %222 = vector.broadcast %cst_50 : f32 to vector<8x128xf32>
    %223 = arith.addf %222, %221 : vector<8x128xf32>
    %224 = arith.divf %222, %223 : vector<8x128xf32>
    %225 = vector.extract_strided_slice %215 {offsets = [0, 128], sizes = [8, 128], strides = [1, 1]} : vector<8x384xf32> to vector<8x128xf32>
    %226 = vector.extract_strided_slice %216 {offsets = [0, 128], sizes = [8, 128], strides = [1, 1]} : vector<8x384xf32> to vector<8x128xf32>
    %227 = arith.addf %225, %226 : vector<8x128xf32>
    %228 = arith.negf %227 : vector<8x128xf32>
    %229 = math.exp %228 : vector<8x128xf32>
    %cst_51 = arith.constant 1.000000e+00 : f32
    %230 = vector.broadcast %cst_51 : f32 to vector<8x128xf32>
    %231 = arith.addf %230, %229 : vector<8x128xf32>
    %232 = arith.divf %230, %231 : vector<8x128xf32>
    %233 = vector.extract_strided_slice %215 {offsets = [0, 256], sizes = [8, 128], strides = [1, 1]} : vector<8x384xf32> to vector<8x128xf32>
    %234 = vector.extract_strided_slice %216 {offsets = [0, 256], sizes = [8, 128], strides = [1, 1]} : vector<8x384xf32> to vector<8x128xf32>
    %235 = arith.addf %234, %10 : vector<8x128xf32>
    %236 = arith.mulf %224, %235 : vector<8x128xf32>
    %237 = arith.addf %233, %236 : vector<8x128xf32>
    %238 = math.tanh %237 : vector<8x128xf32>
    %cst_52 = arith.constant 1.000000e+00 : f32
    %239 = vector.broadcast %cst_52 : f32 to vector<8x128xf32>
    %240 = arith.subf %239, %232 : vector<8x128xf32>
    %241 = arith.mulf %240, %238 : vector<8x128xf32>
    %242 = arith.mulf %232, %214 : vector<8x128xf32>
    %243 = arith.addf %241, %242 : vector<8x128xf32>
    %c0_53 = arith.constant 0 : index
    %c0_54 = arith.constant 0 : index
    %244 = vector.load %arg6[%c0_53, %c0_54] : memref<128x128xf32, #tpu.memory_space<vmem>>, vector<128x128xf32>
    %cst_55 = arith.constant dense<0.000000e+00> : vector<8x128xf32>
    %245 = tpu.matmul %243, %244, %cst_55 {dimension_numbers = #tpu.dot_dimension_numbers<[1], [0], [0], [1], [0, 0, 1, 1], [], []>} : vector<8x128xf32>, vector<128x128xf32>, vector<8x128xf32> -> vector<8x128xf32>
    %c0_56 = arith.constant 0 : index
    %c0_57 = arith.constant 0 : index
    %246 = vector.load %arg7[%c0_56, %c0_57] : memref<1x128xf32, #tpu.memory_space<vmem>>, vector<1x128xf32>
    %247 = vector.broadcast %246 : vector<1x128xf32> to vector<8x128xf32>
    %248 = arith.addf %245, %247 : vector<8x128xf32>
    %249 = arith.negf %248 : vector<8x128xf32>
    %250 = math.exp %249 : vector<8x128xf32>
    %cst_58 = arith.constant 1.000000e+00 : f32
    %251 = vector.broadcast %cst_58 : f32 to vector<8x128xf32>
    %252 = arith.addf %251, %250 : vector<8x128xf32>
    %253 = arith.divf %251, %252 : vector<8x128xf32>
    %254 = tpu.iota {dimensions = array<i32: 1>} : vector<8x128xi32>
    %c2_i32 = arith.constant 2 : i32
    %255 = vector.broadcast %c2_i32 : i32 to vector<8x128xi32>
    %256 = arith.cmpi slt, %254, %255 : vector<8x128xi32>
    %cst_59 = arith.constant 0.000000e+00 : f32
    %257 = vector.broadcast %cst_59 : f32 to vector<8x128xf32>
    %258 = arith.select %256, %253, %257 : vector<8x128xi1>, vector<8x128xf32>
    %c0_60 = arith.constant 0 : index
    %c0_61 = arith.constant 0 : index
    %259 = vector.load %arg8[%c0_60, %c0_61] : memref<8x128xf32, #tpu.memory_space<vmem>>, vector<8x128xf32>
    tpu.vector_store %arg8[%c0_60, %c0_61], %258 {strides = array<i32>} : memref<8x128xf32, #tpu.memory_space<vmem>>, vector<8x128xf32>,
    return
  }
  func.func @transform_0(%arg0: i32) -> (i32, i32) {
    %c0_i32 = arith.constant 0 : i32
    %c0_i32_0 = arith.constant 0 : i32
    %c0_i32_1 = arith.constant 0 : i32
    return %c0_i32, %c0_i32_0 : i32, i32
  }
  func.func @transform_1(%arg0: i32) -> (i32, i32) {
    %c0_i32 = arith.constant 0 : i32
    %c0_i32_0 = arith.constant 0 : i32
    %c0_i32_1 = arith.constant 0 : i32
    return %c0_i32, %c0_i32_0 : i32, i32
  }
  func.func @transform_2(%arg0: i32) -> (i32, i32) {
    %c0_i32 = arith.constant 0 : i32
    %c0_i32_0 = arith.constant 0 : i32
    %c0_i32_1 = arith.constant 0 : i32
    return %c0_i32, %c0_i32_0 : i32, i32
  }
  func.func @transform_3(%arg0: i32) -> (i32, i32) {
    %c0_i32 = arith.constant 0 : i32
    %c0_i32_0 = arith.constant 0 : i32
    %c0_i32_1 = arith.constant 0 : i32
    return %c0_i32, %c0_i32_0 : i32, i32
  }
  func.func @transform_4(%arg0: i32) -> (i32, i32) {
    %c0_i32 = arith.constant 0 : i32
    %c0_i32_0 = arith.constant 0 : i32
    %c0_i32_1 = arith.constant 0 : i32
    return %c0_i32, %c0_i32_0 : i32, i32
  }
  func.func @transform_5(%arg0: i32) -> (i32, i32) {
    %c0_i32 = arith.constant 0 : i32
    %c0_i32_0 = arith.constant 0 : i32
    %c0_i32_1 = arith.constant 0 : i32
    return %c0_i32, %c0_i32_0 : i32, i32
  }
  func.func @transform_6(%arg0: i32) -> (i32, i32) {
    %c0_i32 = arith.constant 0 : i32
    %c0_i32_0 = arith.constant 0 : i32
    %c0_i32_1 = arith.constant 0 : i32
    return %c0_i32, %c0_i32_0 : i32, i32
  }
  func.func @transform_7(%arg0: i32) -> (i32, i32) {
    %c0_i32 = arith.constant 0 : i32
    %c0_i32_0 = arith.constant 0 : i32
    %c0_i32_1 = arith.constant 0 : i32
    return %c0_i32, %c0_i32_0 : i32, i32
  }
}

</mosaic_0001>

<llo_original>
// kernel: gru_forward.1
$region0: #{gru_forward.1}
  #allocation0 [shape = 'u32[]', space=smem, size = 0x4, offset = 0x4, fixed_abs, tag = 'smem constant byte address 0x4 - core index']
  #allocation1 [shape = 'u32[144,128]{1,0:T(1,128)}', space=vmem, size = 0x12000, scoped, tag = 'internal scratch']
  #allocation2 [shape = 'f32[64,384]{1,0:T(8,128)}', space=vmem, size = 0x18000, scoped, tag = 'scratch operand']
  %s0 = inlined_call_operand.vmem [shape: f32[64,128], index: 0, kind: input, shape index: {}]
  %s1 = inlined_call_operand.vmem [shape: f32[128,384], index: 1, kind: input, shape index: {}]
  %s2 = inlined_call_operand.vmem [shape: f32[128,384], index: 2, kind: input, shape index: {}]
  %s3 = inlined_call_operand.vmem [shape: f32[1,384], index: 3, kind: input, shape index: {}]
  %s4 = inlined_call_operand.vmem [shape: f32[1,128], index: 4, kind: input, shape index: {}]
  %s5 = inlined_call_operand.vmem [shape: f32[128,128], index: 5, kind: input, shape index: {}]
  %s6 = inlined_call_operand.vmem [shape: f32[1,128], index: 6, kind: input, shape index: {}]
  %s7 = inlined_call_operand.vmem [shape: f32[8,128], index: 7, kind: output, shape index: {}]
  %s8 = sld [smem:[#allocation0]]
  $region38: #{gru_forward.1} parent=0
    _
  %s10 = ssub.s32 1, %s8
  %s11 = scalar_select 0, %s10, %s8
  // Predicated region
  $region2: #{gru_forward.1} parent=0 // pred_check
    _
  $region3: #{gru_forward.1} parent=0 // pred_check_branch
    %13 = sbr.rel (0) target = $region5
  $region4: #{gru_forward.1} parent=0 // pred_region
    _
  $region5: #{gru_forward.1} parent=0 // pred_fallthru
    _
  // Predicated region
  $region6: #{gru_forward.1} parent=0 // pred_check
    _
  $region7: #{gru_forward.1} parent=0 // pred_check_branch
    %15 = sbr.rel (0) target = $region9
  $region8: #{gru_forward.1} parent=0 // pred_region
    _
  $region9: #{gru_forward.1} parent=0 // pred_fallthru
    _
  // Predicated region
  $region10: #{gru_forward.1} parent=0 // pred_check
    _
  $region11: #{gru_forward.1} parent=0 // pred_check_branch
    %17 = sbr.rel (0) target = $region13
  $region12: #{gru_forward.1} parent=0 // pred_region
    _
  $region13: #{gru_forward.1} parent=0 // pred_fallthru
    _
  // Predicated region
  $region14: #{gru_forward.1} parent=0 // pred_check
    _
  $region15: #{gru_forward.1} parent=0 // pred_check_branch
    %19 = sbr.rel (0) target = $region17
  $region16: #{gru_forward.1} parent=0 // pred_region
    _
  $region17: #{gru_forward.1} parent=0 // pred_fallthru
    _
  // Predicated region
  $region18: #{gru_forward.1} parent=0 // pred_check
    _
  $region19: #{gru_forward.1} parent=0 // pred_check_branch
    %21 = sbr.rel (0) target = $region21
  $region20: #{gru_forward.1} parent=0 // pred_region
    _
  $region21: #{gru_forward.1} parent=0 // pred_fallthru
    _
  // Predicated region
  $region22: #{gru_forward.1} parent=0 // pred_check
    _
  $region23: #{gru_forward.1} parent=0 // pred_check_branch
    %23 = sbr.rel (0) target = $region25
  $region24: #{gru_forward.1} parent=0 // pred_region
    _
  $region25: #{gru_forward.1} parent=0 // pred_fallthru
    _
  // Predicated region
  $region26: #{gru_forward.1} parent=0 // pred_check
    _
  $region27: #{gru_forward.1} parent=0 // pred_check_branch
    %25 = sbr.rel (0) target = $region29
  $region28: #{gru_forward.1} parent=0 // pred_region
    _
  $region29: #{gru_forward.1} parent=0 // pred_fallthru
    _
  %v26 = vld [vmem:[%s0] sm:$0xff]
  %v27 = vld [vmem:[%s0 + $0x8] sm:$0xff]
  %v28 = vld [vmem:[%s0 + $0x10] sm:$0xff]
  %v29 = vld [vmem:[%s0 + $0x18] sm:$0xff]
  %v30 = vld [vmem:[%s0 + $0x20] sm:$0xff]
  %v31 = vld [vmem:[%s0 + $0x28] sm:$0xff]
  %v32 = vld [vmem:[%s0 + $0x30] sm:$0xff]
  %v33 = vld [vmem:[%s0 + $0x38] sm:$0xff]
  %v34 = vld [vmem:[%s1] sm:$0xff]
  %v35 = vld [vmem:[%s1 + $0x8] sm:$0xff]
  %v36 = vld [vmem:[%s1 + $0x10] sm:$0xff]
  %v37 = vld [vmem:[%s1 + $0x18] sm:$0xff]
  %v38 = vld [vmem:[%s1 + $0x20] sm:$0xff]
  %v39 = vld [vmem:[%s1 + $0x28] sm:$0xff]
  %v40 = vld [vmem:[%s1 + $0x30] sm:$0xff]
  %v41 = vld [vmem:[%s1 + $0x38] sm:$0xff]
  %v42 = vld [vmem:[%s1 + $0x40] sm:$0xff]
  %v43 = vld [vmem:[%s1 + $0x48] sm:$0xff]
  %v44 = vld [vmem:[%s1 + $0x50] sm:$0xff]
  %v45 = vld [vmem:[%s1 + $0x58] sm:$0xff]
  %v46 = vld [vmem:[%s1 + $0x60] sm:$0xff]
  %v47 = vld [vmem:[%s1 + $0x68] sm:$0xff]
  %v48 = vld [vmem:[%s1 + $0x70] sm:$0xff]
  %v49 = vld [vmem:[%s1 + $0x78] sm:$0xff]
  %v50 = vld [vmem:[%s1 + $0x80] sm:$0xff]
  %v51 = vld [vmem:[%s1 + $0x88] sm:$0xff]
  %v52 = vld [vmem:[%s1 + $0x90] sm:$0xff]
  %v53 = vld [vmem:[%s1 + $0x98] sm:$0xff]
  %v54 = vld [vmem:[%s1 + $0xa0] sm:$0xff]
  %v55 = vld [vmem:[%s1 + $0xa8] sm:$0xff]
  %v56 = vld [vmem:[%s1 + $0xb0] sm:$0xff]
  %v57 = vld [vmem:[%s1 + $0xb8] sm:$0xff]
  %v58 = vld [vmem:[%s1 + $0xc0] sm:$0xff]
  %v59 = vld [vmem:[%s1 + $0xc8] sm:$0xff]
  %v60 = vld [vmem:[%s1 + $0xd0] sm:$0xff]
  %v61 = vld [vmem:[%s1 + $0xd8] sm:$0xff]
  %v62 = vld [vmem:[%s1 + $0xe0] sm:$0xff]
  %v63 = vld [vmem:[%s1 + $0xe8] sm:$0xff]
  %v64 = vld [vmem:[%s1 + $0xf0] sm:$0xff]
  %v65 = vld [vmem:[%s1 + $0xf8] sm:$0xff]
  %v66 = vld [vmem:[%s1 + $0x100] sm:$0xff]
  %v67 = vld [vmem:[%s1 + $0x108] sm:$0xff]
  %v68 = vld [vmem:[%s1 + $0x110] sm:$0xff]
  %v69 = vld [vmem:[%s1 + $0x118] sm:$0xff]
  %v70 = vld [vmem:[%s1 + $0x120] sm:$0xff]
  %v71 = vld [vmem:[%s1 + $0x128] sm:$0xff]
  %v72 = vld [vmem:[%s1 + $0x130] sm:$0xff]
  %v73 = vld [vmem:[%s1 + $0x138] sm:$0xff]
  %v74 = vld [vmem:[%s1 + $0x140] sm:$0xff]
  %v75 = vld [vmem:[%s1 + $0x148] sm:$0xff]
  %v76 = vld [vmem:[%s1 + $0x150] sm:$0xff]
  %v77 = vld [vmem:[%s1 + $0x158] sm:$0xff]
  %v78 = vld [vmem:[%s1 + $0x160] sm:$0xff]
  %v79 = vld [vmem:[%s1 + $0x168] sm:$0xff]
  %v80 = vld [vmem:[%s1 + $0x170] sm:$0xff]
  %v81 = vld [vmem:[%s1 + $0x178] sm:$0xff]
  %v82 = vld [vmem:[%s3] sm:$0x7]
  %v84 = vlaneseq
  %v85 = vshrl.u32 %v84, 7
  %v86 = vsub.s32 0, %v85
  %v87 = vrot.slane %v82, %v86
  %v88 = vlaneseq
  %v89 = vshrl.u32 %v88, 7
  %v90 = vsub.s32 1, %v89
  %v91 = vrot.slane %v82, %v90
  %v92 = vlaneseq
  %v93 = vshrl.u32 %v92, 7
  %v94 = vsub.s32 2, %v93
  %v95 = vrot.slane %v82, %v94
  %99 = vmatprep.subr.mxu0 %v35
  %100 = vmatpush1.msra.mxu0 %v34
  %101 = vmatprep.subr.mxu0 %v38
  %102 = vmatpush1.msra.mxu0 %v37
  %103 = vmatprep.subr.mxu0 %v41
  %104 = vmatpush1.msra.mxu0 %v40
  %105 = vmatprep.subr.mxu0 %v44
  %106 = vmatpush1.msra.mxu0 %v43
  %107 = vmatprep.subr.mxu0 %v47
  %108 = vmatpush1.msra.mxu0 %v46
  %109 = vmatprep.subr.mxu0 %v50
  %110 = vmatpush1.msra.mxu0 %v49
  %111 = vmatprep.subr.mxu0 %v53
  %112 = vmatpush1.msra.mxu0 %v52
  %113 = vmatprep.subr.mxu0 %v56
  %114 = vmatpush1.msra.mxu0 %v55
  %115 = vmatprep.subr.mxu0 %v59
  %116 = vmatpush1.msra.mxu0 %v58
  %117 = vmatprep.subr.mxu0 %v62
  %118 = vmatpush1.msra.mxu0 %v61
  %119 = vmatprep.subr.mxu0 %v65
  %120 = vmatpush1.msra.mxu0 %v64
  %121 = vmatprep.subr.mxu0 %v68
  %122 = vmatpush1.msra.mxu0 %v67
  %123 = vmatprep.subr.mxu0 %v71
  %124 = vmatpush1.msra.mxu0 %v70
  %125 = vmatprep.subr.mxu0 %v74
  %126 = vmatpush1.msra.mxu0 %v73
  %127 = vmatprep.subr.mxu0 %v77
  %128 = vmatpush1.msra.mxu0 %v76
  %129 = vmatprep.subr.mxu0 %v80
  %130 = vmatpush1.msra.mxu0 %v79
  %131 = vmatprep.subr.mxu0 0.0
  %132 = vmatpush1.msra.mxu0 0.0
  %133 = vmatprep.subr.mxu0 0.0
  %134 = vmatpush1.msra.mxu0 0.0
  %135 = vmatprep.subr.mxu0 0.0
  %136 = vmatpush1.msra.mxu0 0.0
  %137 = vmatprep.subr.mxu0 0.0
  %138 = vmatpush1.msra.mxu0 0.0
  %139 = vmatprep.subr.mxu0 0.0
  %140 = vmatpush1.msra.mxu0 0.0
  %141 = vmatprep.subr.mxu0 0.0
  %142 = vmatpush1.msra.mxu0 0.0
  %143 = vmatprep.subr.mxu0 0.0
  %144 = vmatpush1.msra.mxu0 0.0
  %145 = vmatprep.subr.mxu0 0.0
  %146 = vmatpush1.msra.mxu0 0.0
  %147 = vmatprep.subr.mxu0 0.0
  %148 = vmatpush1.msra.mxu0 0.0
  %149 = vmatprep.subr.mxu0 0.0
  %150 = vmatpush1.msra.mxu0 0.0
  %151 = vmatprep.subr.mxu0 0.0
  %152 = vmatpush1.msra.mxu0 0.0
  %153 = vmatprep.subr.mxu0 0.0
  %154 = vmatpush1.msra.mxu0 0.0
  %155 = vmatprep.subr.mxu0 0.0
  %156 = vmatpush1.msra.mxu0 0.0
  %157 = vmatprep.subr.mxu0 0.0
  %158 = vmatpush1.msra.mxu0 0.0
  %159 = vmatprep.subr.mxu0 0.0
  %160 = vmatpush1.msra.mxu0 0.0
  %161 = vmatprep.subr.mxu0 0.0
  %162 = vmatpush1.msra.mxu0 0.0
  %163 = vmatprep.mubr.f32.mxu0 0.0
  %164 = vmatmul.mubr.f32.gmra.mrb[0].mxu0 %v26
  %v165 = vpop.f32.mrb[0].mxu0
  %v166 = vadd.f32 %v87, %v165
  %v167 = vpop.f32.mrb[0].mxu0
  %v168 = vadd.f32 %v91, %v167
  %169 = vmatprep.mubr.f32.mxu0 0.0
  %170 = vmatmul.mubr.f32.gmra.mrb[0].mxu0 %v27
  %v171 = vpop.f32.mrb[0].mxu0
  %v172 = vadd.f32 %v87, %v171
  %v173 = vpop.f32.mrb[0].mxu0
  %v174 = vadd.f32 %v91, %v173
  %175 = vmatprep.mubr.f32.mxu0 0.0
  %176 = vmatmul.mubr.f32.gmra.mrb[0].mxu0 %v28
  %v177 = vpop.f32.mrb[0].mxu0
  %v178 = vadd.f32 %v87, %v177
  %v179 = vpop.f32.mrb[0].mxu0
  %v180 = vadd.f32 %v91, %v179
  %181 = vmatprep.mubr.f32.mxu0 0.0
  %182 = vmatmul.mubr.f32.gmra.mrb[0].mxu0 %v29
  %v183 = vpop.f32.mrb[0].mxu0
  %v184 = vadd.f32 %v87, %v183
  %v185 = vpop.f32.mrb[0].mxu0
  %v186 = vadd.f32 %v91, %v185
  %187 = vmatprep.mubr.f32.mxu0 0.0
  %188 = vmatmul.mubr.f32.gmra.mrb[0].mxu0 %v30
  %v189 = vpop.f32.mrb[0].mxu0
  %v190 = vadd.f32 %v87, %v189
  %v191 = vpop.f32.mrb[0].mxu0
  %v192 = vadd.f32 %v91, %v191
  %193 = vmatprep.mubr.f32.mxu0 0.0
  %194 = vmatmul.mubr.f32.gmra.mrb[0].mxu0 %v31
  %v195 = vpop.f32.mrb[0].mxu0
  %v196 = vadd.f32 %v87, %v195
  %v197 = vpop.f32.mrb[0].mxu0
  %v198 = vadd.f32 %v91, %v197
  %199 = vmatprep.mubr.f32.mxu0 0.0
  %200 = vmatmul.mubr.f32.gmra.mrb[0].mxu0 %v32
  %v201 = vpop.f32.mrb[0].mxu0
  %v202 = vadd.f32 %v87, %v201
  %v203 = vpop.f32.mrb[0].mxu0
  %v204 = vadd.f32 %v91, %v203
  %205 = vmatprep.mubr.f32.mxu0 0.0
  %206 = vmatmul.mubr.f32.gmra.mrb[0].mxu0 %v33
  %v207 = vpop.f32.mrb[0].mxu0
  %v208 = vadd.f32 %v87, %v207
  %v209 = vpop.f32.mrb[0].mxu0
  %v210 = vadd.f32 %v91, %v209
  %211 = vdwg.mxu0
  %212 = vmatprep.subr.mxu0 0.0
  %213 = vmatpush1.msra.mxu0 %v36
  %214 = vmatprep.subr.mxu0 0.0
  %215 = vmatpush1.msra.mxu0 %v39
  %216 = vmatprep.subr.mxu0 0.0
  %217 = vmatpush1.msra.mxu0 %v42
  %218 = vmatprep.subr.mxu0 0.0
  %219 = vmatpush1.msra.mxu0 %v45
  %220 = vmatprep.subr.mxu0 0.0
  %221 = vmatpush1.msra.mxu0 %v48
  %222 = vmatprep.subr.mxu0 0.0
  %223 = vmatpush1.msra.mxu0 %v51
  %224 = vmatprep.subr.mxu0 0.0
  %225 = vmatpush1.msra.mxu0 %v54
  %226 = vmatprep.subr.mxu0 0.0
  %227 = vmatpush1.msra.mxu0 %v57
  %228 = vmatprep.subr.mxu0 0.0
  %229 = vmatpush1.msra.mxu0 %v60
  %230 = vmatprep.subr.mxu0 0.0
  %231 = vmatpush1.msra.mxu0 %v63
  %232 = vmatprep.subr.mxu0 0.0
  %233 = vmatpush1.msra.mxu0 %v66
  %234 = vmatprep.subr.mxu0 0.0
  %235 = vmatpush1.msra.mxu0 %v69
  %236 = vmatprep.subr.mxu0 0.0
  %237 = vmatpush1.msra.mxu0 %v72
  %238 = vmatprep.subr.mxu0 0.0
  %239 = vmatpush1.msra.mxu0 %v75
  %240 = vmatprep.subr.mxu0 0.0
  %241 = vmatpush1.msra.mxu0 %v78
  %242 = vmatprep.subr.mxu0 0.0
  %243 = vmatpush1.msra.mxu0 %v81
  %244 = vmatprep.subr.mxu0 0.0
  %245 = vmatpush1.msra.mxu0 0.0
  %246 = vmatprep.subr.mxu0 0.0
  %247 = vmatpush1.msra.mxu0 0.0
  %248 = vmatprep.subr.mxu0 0.0
  %249 = vmatpush1.msra.mxu0 0.0
  %250 = vmatprep.subr.mxu0 0.0
  %251 = vmatpush1.msra.mxu0 0.0
  %252 = vmatprep.subr.mxu0 0.0
  %253 = vmatpush1.msra.mxu0 0.0
  %254 = vmatprep.subr.mxu0 0.0
  %255 = vmatpush1.msra.mxu0 0.0
  %256 = vmatprep.subr.mxu0 0.0
  %257 = vmatpush1.msra.mxu0 0.0
  %258 = vmatprep.subr.mxu0 0.0
  %259 = vmatpush1.msra.mxu0 0.0
  %260 = vmatprep.subr.mxu0 0.0
  %261 = vmatpush1.msra.mxu0 0.0
  %262 = vmatprep.subr.mxu0 0.0
  %263 = vmatpush1.msra.mxu0 0.0
  %264 = vmatprep.subr.mxu0 0.0
  %265 = vmatpush1.msra.mxu0 0.0
  %266 = vmatprep.subr.mxu0 0.0
  %267 = vmatpush1.msra.mxu0 0.0
  %268 = vmatprep.subr.mxu0 0.0
  %269 = vmatpush1.msra.mxu0 0.0
  %270 = vmatprep.subr.mxu0 0.0
  %271 = vmatpush1.msra.mxu0 0.0
  %272 = vmatprep.subr.mxu0 0.0
  %273 = vmatpush1.msra.mxu0 0.0
  %274 = vmatprep.subr.mxu0 0.0
  %275 = vmatpush1.msra.mxu0 0.0
  %276 = vmatprep.mubr.f32.mxu0 0.0
  %277 = vmatmul.mubr.f32.gmra.mrb[0].mxu0 %v26
  %v278 = vpop.f32.mrb[0].mxu0
  %v279 = vadd.f32 %v95, %v278
  %v280 = vpop.f32.mrb[0].mxu0
  %281 = vmatprep.mubr.f32.mxu0 0.0
  %282 = vmatmul.mubr.f32.gmra.mrb[0].mxu0 %v27
  %v283 = vpop.f32.mrb[0].mxu0
  %v284 = vadd.f32 %v95, %v283
  %v285 = vpop.f32.mrb[0].mxu0
  %286 = vmatprep.mubr.f32.mxu0 0.0
  %287 = vmatmul.mubr.f32.gmra.mrb[0].mxu0 %v28
  %v288 = vpop.f32.mrb[0].mxu0
  %v289 = vadd.f32 %v95, %v288
  %v290 = vpop.f32.mrb[0].mxu0
  %291 = vmatprep.mubr.f32.mxu0 0.0
  %292 = vmatmul.mubr.f32.gmra.mrb[0].mxu0 %v29
  %v293 = vpop.f32.mrb[0].mxu0
  %v294 = vadd.f32 %v95, %v293
  %v295 = vpop.f32.mrb[0].mxu0
  %296 = vmatprep.mubr.f32.mxu0 0.0
  %297 = vmatmul.mubr.f32.gmra.mrb[0].mxu0 %v30
  %v298 = vpop.f32.mrb[0].mxu0
  %v299 = vadd.f32 %v95, %v298
  %v300 = vpop.f32.mrb[0].mxu0
  %301 = vmatprep.mubr.f32.mxu0 0.0
  %302 = vmatmul.mubr.f32.gmra.mrb[0].mxu0 %v31
  %v303 = vpop.f32.mrb[0].mxu0
  %v304 = vadd.f32 %v95, %v303
  %v305 = vpop.f32.mrb[0].mxu0
  %306 = vmatprep.mubr.f32.mxu0 0.0
  %307 = vmatmul.mubr.f32.gmra.mrb[0].mxu0 %v32
  %v308 = vpop.f32.mrb[0].mxu0
  %v309 = vadd.f32 %v95, %v308
  %v310 = vpop.f32.mrb[0].mxu0
  %311 = vmatprep.mubr.f32.mxu0 0.0
  %312 = vmatmul.mubr.f32.gmra.mrb[0].mxu0 %v33
  %v313 = vpop.f32.mrb[0].mxu0
  %v314 = vadd.f32 %v95, %v313
  %v315 = vpop.f32.mrb[0].mxu0
  %316 = vdwg.mxu0
  %317 = vst [vmem:[#allocation2] sm:$0xff] %v166
  %318 = vst [vmem:[#allocation2 + $0x8] sm:$0xff] %v168
  %319 = vst [vmem:[#allocation2 + $0x10] sm:$0xff] %v279
  %320 = vst [vmem:[#allocation2 + $0x18] sm:$0xff] %v172
  %321 = vst [vmem:[#allocation2 + $0x20] sm:$0xff] %v174
  %322 = vst [vmem:[#allocation2 + $0x28] sm:$0xff] %v284
  %323 = vst [vmem:[#allocation2 + $0x30] sm:$0xff] %v178
  %324 = vst [vmem:[#allocation2 + $0x38] sm:$0xff] %v180
  %325 = vst [vmem:[#allocation2 + $0x40] sm:$0xff] %v289
  %326 = vst [vmem:[#allocation2 + $0x48] sm:$0xff] %v184
  %327 = vst [vmem:[#allocation2 + $0x50] sm:$0xff] %v186
  %328 = vst [vmem:[#allocation2 + $0x58] sm:$0xff] %v294
  %329 = vst [vmem:[#allocation2 + $0x60] sm:$0xff] %v190
  %330 = vst [vmem:[#allocation2 + $0x68] sm:$0xff] %v192
  %331 = vst [vmem:[#allocation2 + $0x70] sm:$0xff] %v299
  %332 = vst [vmem:[#allocation2 + $0x78] sm:$0xff] %v196
  %333 = vst [vmem:[#allocation2 + $0x80] sm:$0xff] %v198
  %334 = vst [vmem:[#allocation2 + $0x88] sm:$0xff] %v304
  %335 = vst [vmem:[#allocation2 + $0x90] sm:$0xff] %v202
  %336 = vst [vmem:[#allocation2 + $0x98] sm:$0xff] %v204
  %337 = vst [vmem:[#allocation2 + $0xa0] sm:$0xff] %v309
  %338 = vst [vmem:[#allocation2 + $0xa8] sm:$0xff] %v208
  %339 = vst [vmem:[#allocation2 + $0xb0] sm:$0xff] %v210
  %340 = vst [vmem:[#allocation2 + $0xb8] sm:$0xff] %v314
  %v341 = vld [vmem:[%s2] sm:$0xff]
  %v342 = vld [vmem:[%s2 + $0x8] sm:$0xff]
  %v343 = vld [vmem:[%s2 + $0x10] sm:$0xff]
  %v344 = vld [vmem:[%s2 + $0x18] sm:$0xff]
  %v345 = vld [vmem:[%s2 + $0x20] sm:$0xff]
  %v346 = vld [vmem:[%s2 + $0x28] sm:$0xff]
  %v347 = vld [vmem:[%s2 + $0x30] sm:$0xff]
  %v348 = vld [vmem:[%s2 + $0x38] sm:$0xff]
  %v349 = vld [vmem:[%s2 + $0x40] sm:$0xff]
  %v350 = vld [vmem:[%s2 + $0x48] sm:$0xff]
  %v351 = vld [vmem:[%s2 + $0x50] sm:$0xff]
  %v352 = vld [vmem:[%s2 + $0x58] sm:$0xff]
  %v353 = vld [vmem:[%s2 + $0x60] sm:$0xff]
  %v354 = vld [vmem:[%s2 + $0x68] sm:$0xff]
  %v355 = vld [vmem:[%s2 + $0x70] sm:$0xff]
  %v356 = vld [vmem:[%s2 + $0x78] sm:$0xff]
  %v357 = vld [vmem:[%s2 + $0x80] sm:$0xff]
  %v358 = vld [vmem:[%s2 + $0x88] sm:$0xff]
  %v359 = vld [vmem:[%s2 + $0x90] sm:$0xff]
  %v360 = vld [vmem:[%s2 + $0x98] sm:$0xff]
  %v361 = vld [vmem:[%s2 + $0xa0] sm:$0xff]
  %v362 = vld [vmem:[%s2 + $0xa8] sm:$0xff]
  %v363 = vld [vmem:[%s2 + $0xb0] sm:$0xff]
  %v364 = vld [vmem:[%s2 + $0xb8] sm:$0xff]
  %v365 = vld [vmem:[%s2 + $0xc0] sm:$0xff]
  %v366 = vld [vmem:[%s2 + $0xc8] sm:$0xff]
  %v367 = vld [vmem:[%s2 + $0xd0] sm:$0xff]
  %v368 = vld [vmem:[%s2 + $0xd8] sm:$0xff]
  %v369 = vld [vmem:[%s2 + $0xe0] sm:$0xff]
  %v370 = vld [vmem:[%s2 + $0xe8] sm:$0xff]
  %v371 = vld [vmem:[%s2 + $0xf0] sm:$0xff]
  %v372 = vld [vmem:[%s2 + $0xf8] sm:$0xff]
  %v373 = vld [vmem:[%s2 + $0x100] sm:$0xff]
  %v374 = vld [vmem:[%s2 + $0x108] sm:$0xff]
  %v375 = vld [vmem:[%s2 + $0x110] sm:$0xff]
  %v376 = vld [vmem:[%s2 + $0x118] sm:$0xff]
  %v377 = vld [vmem:[%s2 + $0x120] sm:$0xff]
  %v378 = vld [vmem:[%s2 + $0x128] sm:$0xff]
  %v379 = vld [vmem:[%s2 + $0x130] sm:$0xff]
  %v380 = vld [vmem:[%s2 + $0x138] sm:$0xff]
  %v381 = vld [vmem:[%s2 + $0x140] sm:$0xff]
  %v382 = vld [vmem:[%s2 + $0x148] sm:$0xff]
  %v383 = vld [vmem:[%s2 + $0x150] sm:$0xff]
  %v384 = vld [vmem:[%s2 + $0x158] sm:$0xff]
  %v385 = vld [vmem:[%s2 + $0x160] sm:$0xff]
  %v386 = vld [vmem:[%s2 + $0x168] sm:$0xff]
  %v387 = vld [vmem:[%s2 + $0x170] sm:$0xff]
  %v388 = vld [vmem:[%s2 + $0x178] sm:$0xff]
  %v389 = vld [vmem:[%s4] sm:$0x1]
  %v391 = vlaneseq
  %v392 = vshrl.u32 %v391, 7
  %v393 = vsub.s32 0, %v392
  %v394 = vrot.slane %v389, %v393
  %v396 = vld [vmem:[#allocation2] sm:$0xff]
  %v397 = vld [vmem:[#allocation2 + $0x8] sm:$0xff]
  %v398 = vld [vmem:[#allocation2 + $0x10] sm:$0xff]
  %399 = vmatprep.subr.mxu0 %v342
  %400 = vmatpush1.msra.mxu0 %v341
  %401 = vmatprep.subr.mxu0 %v345
  %402 = vmatpush1.msra.mxu0 %v344
  %403 = vmatprep.subr.mxu0 %v348
  %404 = vmatpush1.msra.mxu0 %v347
  %405 = vmatprep.subr.mxu0 %v351
  %406 = vmatpush1.msra.mxu0 %v350
  %407 = vmatprep.subr.mxu0 %v354
  %408 = vmatpush1.msra.mxu0 %v353
  %409 = vmatprep.subr.mxu0 %v357
  %410 = vmatpush1.msra.mxu0 %v356
  %411 = vmatprep.subr.mxu0 %v360
  %412 = vmatpush1.msra.mxu0 %v359
  %413 = vmatprep.subr.mxu0 %v363
  %414 = vmatpush1.msra.mxu0 %v362
  %415 = vmatprep.subr.mxu0 %v366
  %416 = vmatpush1.msra.mxu0 %v365
  %417 = vmatprep.subr.mxu0 %v369
  %418 = vmatpush1.msra.mxu0 %v368
  %419 = vmatprep.subr.mxu0 %v372
  %420 = vmatpush1.msra.mxu0 %v371
  %421 = vmatprep.subr.mxu0 %v375
  %422 = vmatpush1.msra.mxu0 %v374
  %423 = vmatprep.subr.mxu0 %v378
  %424 = vmatpush1.msra.mxu0 %v377
  %425 = vmatprep.subr.mxu0 %v381
  %426 = vmatpush1.msra.mxu0 %v380
  %427 = vmatprep.subr.mxu0 %v384
  %428 = vmatpush1.msra.mxu0 %v383
  %429 = vmatprep.subr.mxu0 %v387
  %430 = vmatpush1.msra.mxu0 %v386
  %431 = vmatprep.subr.mxu0 0.0
  %432 = vmatpush1.msra.mxu0 0.0
  %433 = vmatprep.subr.mxu0 0.0
  %434 = vmatpush1.msra.mxu0 0.0
  %435 = vmatprep.subr.mxu0 0.0
  %436 = vmatpush1.msra.mxu0 0.0
  %437 = vmatprep.subr.mxu0 0.0
  %438 = vmatpush1.msra.mxu0 0.0
  %439 = vmatprep.subr.mxu0 0.0
  %440 = vmatpush1.msra.mxu0 0.0
  %441 = vmatprep.subr.mxu0 0.0
  %442 = vmatpush1.msra.mxu0 0.0
  %443 = vmatprep.subr.mxu0 0.0
  %444 = vmatpush1.msra.mxu0 0.0
  %445 = vmatprep.subr.mxu0 0.0
  %446 = vmatpush1.msra.mxu0 0.0
  %447 = vmatprep.subr.mxu0 0.0
  %448 = vmatpush1.msra.mxu0 0.0
  %449 = vmatprep.subr.mxu0 0.0
  %450 = vmatpush1.msra.mxu0 0.0
  %451 = vmatprep.subr.mxu0 0.0
  %452 = vmatpush1.msra.mxu0 0.0
  %453 = vmatprep.subr.mxu0 0.0
  %454 = vmatpush1.msra.mxu0 0.0
  %455 = vmatprep.subr.mxu0 0.0
  %456 = vmatpush1.msra.mxu0 0.0
  %457 = vmatprep.subr.mxu0 0.0
  %458 = vmatpush1.msra.mxu0 0.0
  %459 = vmatprep.subr.mxu0 0.0
  %460 = vmatpush1.msra.mxu0 0.0
  %461 = vmatprep.subr.mxu0 0.0
  %462 = vmatpush1.msra.mxu0 0.0
  %463 = vmatprep.mubr.f32.mxu0 0.0
  %464 = vmatmul.mubr.f32.gmra.mrb[0].mxu0 0.0
  %v465 = vpop.f32.mrb[0].mxu0
  %v466 = vadd.f32 0.0, %v465
  %v467 = vpop.f32.mrb[0].mxu0
  %v468 = vadd.f32 0.0, %v467
  %469 = vdwg.mxu0
  %470 = vmatprep.subr.mxu0 0.0
  %471 = vmatpush1.msra.mxu0 %v343
  %472 = vmatprep.subr.mxu0 0.0
  %473 = vmatpush1.msra.mxu0 %v346
  %474 = vmatprep.subr.mxu0 0.0
  %475 = vmatpush1.msra.mxu0 %v349
  %476 = vmatprep.subr.mxu0 0.0
  %477 = vmatpush1.msra.mxu0 %v352
  %478 = vmatprep.subr.mxu0 0.0
  %479 = vmatpush1.msra.mxu0 %v355
  %480 = vmatprep.subr.mxu0 0.0
  %481 = vmatpush1.msra.mxu0 %v358
  %482 = vmatprep.subr.mxu0 0.0
  %483 = vmatpush1.msra.mxu0 %v361
  %484 = vmatprep.subr.mxu0 0.0
  %485 = vmatpush1.msra.mxu0 %v364
  %486 = vmatprep.subr.mxu0 0.0
  %487 = vmatpush1.msra.mxu0 %v367
  %488 = vmatprep.subr.mxu0 0.0
  %489 = vmatpush1.msra.mxu0 %v370
  %490 = vmatprep.subr.mxu0 0.0
  %491 = vmatpush1.msra.mxu0 %v373
  %492 = vmatprep.subr.mxu0 0.0
  %493 = vmatpush1.msra.mxu0 %v376
  %494 = vmatprep.subr.mxu0 0.0
  %495 = vmatpush1.msra.mxu0 %v379
  %496 = vmatprep.subr.mxu0 0.0
  %497 = vmatpush1.msra.mxu0 %v382
  %498 = vmatprep.subr.mxu0 0.0
  %499 = vmatpush1.msra.mxu0 %v385
  %500 = vmatprep.subr.mxu0 0.0
  %501 = vmatpush1.msra.mxu0 %v388
  %502 = vmatprep.subr.mxu0 0.0
  %503 = vmatpush1.msra.mxu0 0.0
  %504 = vmatprep.subr.mxu0 0.0
  %505 = vmatpush1.msra.mxu0 0.0
  %506 = vmatprep.subr.mxu0 0.0
  %507 = vmatpush1.msra.mxu0 0.0
  %508 = vmatprep.subr.mxu0 0.0
  %509 = vmatpush1.msra.mxu0 0.0
  %510 = vmatprep.subr.mxu0 0.0
  %511 = vmatpush1.msra.mxu0 0.0
  %512 = vmatprep.subr.mxu0 0.0
  %513 = vmatpush1.msra.mxu0 0.0
  %514 = vmatprep.subr.mxu0 0.0
  %515 = vmatpush1.msra.mxu0 0.0
  %516 = vmatprep.subr.mxu0 0.0
  %517 = vmatpush1.msra.mxu0 0.0
  %518 = vmatprep.subr.mxu0 0.0
  %519 = vmatpush1.msra.mxu0 0.0
  %520 = vmatprep.subr.mxu0 0.0
  %521 = vmatpush1.msra.mxu0 0.0
  %522 = vmatprep.subr.mxu0 0.0
  %523 = vmatpush1.msra.mxu0 0.0
  %524 = vmatprep.subr.mxu0 0.0
  %525 = vmatpush1.msra.mxu0 0.0
  %526 = vmatprep.subr.mxu0 0.0
  %527 = vmatpush1.msra.mxu0 0.0
  %528 = vmatprep.subr.mxu0 0.0
  %529 = vmatpush1.msra.mxu0 0.0
  %530 = vmatprep.subr.mxu0 0.0
  %531 = vmatpush1.msra.mxu0 0.0
  %532 = vmatprep.subr.mxu0 0.0
  %533 = vmatpush1.msra.mxu0 0.0
  %534 = vmatprep.mubr.f32.mxu0 0.0
  %535 = vmatmul.mubr.f32.gmra.mrb[0].mxu0 0.0
  %v536 = vpop.f32.mrb[0].mxu0
  %v537 = vadd.f32 0.0, %v536
  %v538 = vpop.f32.mrb[0].mxu0
  %539 = vdwg.mxu0
  %v540 = vadd.f32 %v396, %v466
  %v541 = vxor.u32 %v540, 2147483648
  %v542 = vmul.f32 %v541, 1.442695
  %v543 = vpow.pop %v542
  %v544 = vadd.f32 %v543, 1.0
  %v545 = vrcp.pop %v544
  %v546 = vmul.f32 1.0, %v545
  %v547 = vadd.f32 %v397, %v468
  %v548 = vxor.u32 %v547, 2147483648
  %v549 = vmul.f32 %v548, 1.442695
  %v550 = vpow.pop %v549
  %v551 = vadd.f32 %v550, 1.0
  %v552 = vrcp.pop %v551
  %v553 = vmul.f32 1.0, %v552
  %v554 = vadd.f32 %v537, %v394
  %v555 = vmul.f32 %v546, %v554
  %v556 = vadd.f32 %v398, %v555
  %v557 = vtanh.pop %v556
  %v558 = vsub.f32 1.0, %v553
  %v559 = vmul.f32 %v558, %v557
  %v560 = vmul.f32 %v553, 0.0
  %v561 = vadd.f32 %v559, %v560
  %v562 = vld [vmem:[#allocation2 + $0x18] sm:$0xff]
  %v563 = vld [vmem:[#allocation2 + $0x20] sm:$0xff]
  %v564 = vld [vmem:[#allocation2 + $0x28] sm:$0xff]
  %565 = vmatprep.subr.mxu0 %v342
  %566 = vmatpush1.msra.mxu0 %v341
  %567 = vmatprep.subr.mxu0 %v345
  %568 = vmatpush1.msra.mxu0 %v344
  %569 = vmatprep.subr.mxu0 %v348
  %570 = vmatpush1.msra.mxu0 %v347
  %571 = vmatprep.subr.mxu0 %v351
  %572 = vmatpush1.msra.mxu0 %v350
  %573 = vmatprep.subr.mxu0 %v354
  %574 = vmatpush1.msra.mxu0 %v353
  %575 = vmatprep.subr.mxu0 %v357
  %576 = vmatpush1.msra.mxu0 %v356
  %577 = vmatprep.subr.mxu0 %v360
  %578 = vmatpush1.msra.mxu0 %v359
  %579 = vmatprep.subr.mxu0 %v363
  %580 = vmatpush1.msra.mxu0 %v362
  %581 = vmatprep.subr.mxu0 %v366
  %582 = vmatpush1.msra.mxu0 %v365
  %583 = vmatprep.subr.mxu0 %v369
  %584 = vmatpush1.msra.mxu0 %v368
  %585 = vmatprep.subr.mxu0 %v372
  %586 = vmatpush1.msra.mxu0 %v371
  %587 = vmatprep.subr.mxu0 %v375
  %588 = vmatpush1.msra.mxu0 %v374
  %589 = vmatprep.subr.mxu0 %v378
  %590 = vmatpush1.msra.mxu0 %v377
  %591 = vmatprep.subr.mxu0 %v381
  %592 = vmatpush1.msra.mxu0 %v380
  %593 = vmatprep.subr.mxu0 %v384
  %594 = vmatpush1.msra.mxu0 %v383
  %595 = vmatprep.subr.mxu0 %v387
  %596 = vmatpush1.msra.mxu0 %v386
  %597 = vmatprep.subr.mxu0 0.0
  %598 = vmatpush1.msra.mxu0 0.0
  %599 = vmatprep.subr.mxu0 0.0
  %600 = vmatpush1.msra.mxu0 0.0
  %601 = vmatprep.subr.mxu0 0.0
  %602 = vmatpush1.msra.mxu0 0.0
  %603 = vmatprep.subr.mxu0 0.0
  %604 = vmatpush1.msra.mxu0 0.0
  %605 = vmatprep.subr.mxu0 0.0
  %606 = vmatpush1.msra.mxu0 0.0
  %607 = vmatprep.subr.mxu0 0.0
  %608 = vmatpush1.msra.mxu0 0.0
  %609 = vmatprep.subr.mxu0 0.0
  %610 = vmatpush1.msra.mxu0 0.0
  %611 = vmatprep.subr.mxu0 0.0
  %612 = vmatpush1.msra.mxu0 0.0
  %613 = vmatprep.subr.mxu0 0.0
  %614 = vmatpush1.msra.mxu0 0.0
  %615 = vmatprep.subr.mxu0 0.0
  %616 = vmatpush1.msra.mxu0 0.0
  %617 = vmatprep.subr.mxu0 0.0
  %618 = vmatpush1.msra.mxu0 0.0
  %619 = vmatprep.subr.mxu0 0.0
  %620 = vmatpush1.msra.mxu0 0.0
  %621 = vmatprep.subr.mxu0 0.0
  %622 = vmatpush1.msra.mxu0 0.0
  %623 = vmatprep.subr.mxu0 0.0
  %624 = vmatpush1.msra.mxu0 0.0
  %625 = vmatprep.subr.mxu0 0.0
  %626 = vmatpush1.msra.mxu0 0.0
  %627 = vmatprep.subr.mxu0 0.0
  %628 = vmatpush1.msra.mxu0 0.0
  %629 = vmatprep.mubr.f32.mxu0 0.0
  %630 = vmatmul.mubr.f32.gmra.mrb[0].mxu0 %v561
  %v631 = vpop.f32.mrb[0].mxu0
  %v632 = vadd.f32 0.0, %v631
  %v633 = vpop.f32.mrb[0].mxu0
  %v634 = vadd.f32 0.0, %v633
  %635 = vdwg.mxu0
  %636 = vmatprep.subr.mxu0 0.0
  %637 = vmatpush1.msra.mxu0 %v343
  %638 = vmatprep.subr.mxu0 0.0
  %639 = vmatpush1.msra.mxu0 %v346
  %640 = vmatprep.subr.mxu0 0.0
  %641 = vmatpush1.msra.mxu0 %v349
  %642 = vmatprep.subr.mxu0 0.0
  %643 = vmatpush1.msra.mxu0 %v352
  %644 = vmatprep.subr.mxu0 0.0
  %645 = vmatpush1.msra.mxu0 %v355
  %646 = vmatprep.subr.mxu0 0.0
  %647 = vmatpush1.msra.mxu0 %v358
  %648 = vmatprep.subr.mxu0 0.0
  %649 = vmatpush1.msra.mxu0 %v361
  %650 = vmatprep.subr.mxu0 0.0
  %651 = vmatpush1.msra.mxu0 %v364
  %652 = vmatprep.subr.mxu0 0.0
  %653 = vmatpush1.msra.mxu0 %v367
  %654 = vmatprep.subr.mxu0 0.0
  %655 = vmatpush1.msra.mxu0 %v370
  %656 = vmatprep.subr.mxu0 0.0
  %657 = vmatpush1.msra.mxu0 %v373
  %658 = vmatprep.subr.mxu0 0.0
  %659 = vmatpush1.msra.mxu0 %v376
  %660 = vmatprep.subr.mxu0 0.0
  %661 = vmatpush1.msra.mxu0 %v379
  %662 = vmatprep.subr.mxu0 0.0
  %663 = vmatpush1.msra.mxu0 %v382
  %664 = vmatprep.subr.mxu0 0.0
  %665 = vmatpush1.msra.mxu0 %v385
  %666 = vmatprep.subr.mxu0 0.0
  %667 = vmatpush1.msra.mxu0 %v388
  %668 = vmatprep.subr.mxu0 0.0
  %669 = vmatpush1.msra.mxu0 0.0
  %670 = vmatprep.subr.mxu0 0.0
  %671 = vmatpush1.msra.mxu0 0.0
  %672 = vmatprep.subr.mxu0 0.0
  %673 = vmatpush1.msra.mxu0 0.0
  %674 = vmatprep.subr.mxu0 0.0
  %675 = vmatpush1.msra.mxu0 0.0
  %676 = vmatprep.subr.mxu0 0.0
  %677 = vmatpush1.msra.mxu0 0.0
  %678 = vmatprep.subr.mxu0 0.0
  %679 = vmatpush1.msra.mxu0 0.0
  %680 = vmatprep.subr.mxu0 0.0
  %681 = vmatpush1.msra.mxu0 0.0
  %682 = vmatprep.subr.mxu0 0.0
  %683 = vmatpush1.msra.mxu0 0.0
  %684 = vmatprep.subr.mxu0 0.0
  %685 = vmatpush1.msra.mxu0 0.0
  %686 = vmatprep.subr.mxu0 0.0
  %687 = vmatpush1.msra.mxu0 0.0
  %688 = vmatprep.subr.mxu0 0.0
  %689 = vmatpush1.msra.mxu0 0.0
  %690 = vmatprep.subr.mxu0 0.0
  %691 = vmatpush1.msra.mxu0 0.0
  %692 = vmatprep.subr.mxu0 0.0
  %693 = vmatpush1.msra.mxu0 0.0
  %694 = vmatprep.subr.mxu0 0.0
  %695 = vmatpush1.msra.mxu0 0.0
  %696 = vmatprep.subr.mxu0 0.0
  %697 = vmatpush1.msra.mxu0 0.0
  %698 = vmatprep.subr.mxu0 0.0
  %699 = vmatpush1.msra.mxu0 0.0
  %700 = vmatprep.mubr.f32.mxu0 0.0
  %701 = vmatmul.mubr.f32.gmra.mrb[0].mxu0 %v561
  %v702 = vpop.f32.mrb[0].mxu0
  %v703 = vadd.f32 0.0, %v702
  %v704 = vpop.f32.mrb[0].mxu0
  %705 = vdwg.mxu0
  %v706 = vadd.f32 %v562, %v632
  %v707 = vxor.u32 %v706, 2147483648
  %v708 = vmul.f32 %v707, 1.442695
  %v709 = vpow.pop %v708
  %v710 = vadd.f32 %v709, 1.0
  %v711 = vrcp.pop %v710
  %v712 = vmul.f32 1.0, %v711
  %v713 = vadd.f32 %v563, %v634
  %v714 = vxor.u32 %v713, 2147483648
  %v715 = vmul.f32 %v714, 1.442695
  %v716 = vpow.pop %v715
  %v717 = vadd.f32 %v716, 1.0
  %v718 = vrcp.pop %v717
  %v719 = vmul.f32 1.0, %v718
  %v720 = vadd.f32 %v703, %v394
  %v721 = vmul.f32 %v712, %v720
  %v722 = vadd.f32 %v564, %v721
  %v723 = vtanh.pop %v722
  %v724 = vsub.f32 1.0, %v719
  %v725 = vmul.f32 %v724, %v723
  %v726 = vmul.f32 %v719, %v561
  %v727 = vadd.f32 %v725, %v726
  %v728 = vld [vmem:[#allocation2 + $0x30] sm:$0xff]
  %v729 = vld [vmem:[#allocation2 + $0x38] sm:$0xff]
  %v730 = vld [vmem:[#allocation2 + $0x40] sm:$0xff]
  %731 = vmatprep.subr.mxu0 %v342
  %732 = vmatpush1.msra.mxu0 %v341
  %733 = vmatprep.subr.mxu0 %v345
  %734 = vmatpush1.msra.mxu0 %v344
  %735 = vmatprep.subr.mxu0 %v348
  %736 = vmatpush1.msra.mxu0 %v347
  %737 = vmatprep.subr.mxu0 %v351
  %738 = vmatpush1.msra.mxu0 %v350
  %739 = vmatprep.subr.mxu0 %v354
  %740 = vmatpush1.msra.mxu0 %v353
  %741 = vmatprep.subr.mxu0 %v357
  %742 = vmatpush1.msra.mxu0 %v356
  %743 = vmatprep.subr.mxu0 %v360
  %744 = vmatpush1.msra.mxu0 %v359
  %745 = vmatprep.subr.mxu0 %v363
  %746 = vmatpush1.msra.mxu0 %v362
  %747 = vmatprep.subr.mxu0 %v366
  %748 = vmatpush1.msra.mxu0 %v365
  %749 = vmatprep.subr.mxu0 %v369
  %750 = vmatpush1.msra.mxu0 %v368
  %751 = vmatprep.subr.mxu0 %v372
  %752 = vmatpush1.msra.mxu0 %v371
  %753 = vmatprep.subr.mxu0 %v375
  %754 = vmatpush1.msra.mxu0 %v374
  %755 = vmatprep.subr.mxu0 %v378
  %756 = vmatpush1.msra.mxu0 %v377
  %757 = vmatprep.subr.mxu0 %v381
  %758 = vmatpush1.msra.mxu0 %v380
  %759 = vmatprep.subr.mxu0 %v384
  %760 = vmatpush1.msra.mxu0 %v383
  %761 = vmatprep.subr.mxu0 %v387
  %762 = vmatpush1.msra.mxu0 %v386
  %763 = vmatprep.subr.mxu0 0.0
  %764 = vmatpush1.msra.mxu0 0.0
  %765 = vmatprep.subr.mxu0 0.0
  %766 = vmatpush1.msra.mxu0 0.0
  %767 = vmatprep.subr.mxu0 0.0
  %768 = vmatpush1.msra.mxu0 0.0
  %769 = vmatprep.subr.mxu0 0.0
  %770 = vmatpush1.msra.mxu0 0.0
  %771 = vmatprep.subr.mxu0 0.0
  %772 = vmatpush1.msra.mxu0 0.0
  %773 = vmatprep.subr.mxu0 0.0
  %774 = vmatpush1.msra.mxu0 0.0
  %775 = vmatprep.subr.mxu0 0.0
  %776 = vmatpush1.msra.mxu0 0.0
  %777 = vmatprep.subr.mxu0 0.0
  %778 = vmatpush1.msra.mxu0 0.0
  %779 = vmatprep.subr.mxu0 0.0
  %780 = vmatpush1.msra.mxu0 0.0
  %781 = vmatprep.subr.mxu0 0.0
  %782 = vmatpush1.msra.mxu0 0.0
  %783 = vmatprep.subr.mxu0 0.0
  %784 = vmatpush1.msra.mxu0 0.0
  %785 = vmatprep.subr.mxu0 0.0
  %786 = vmatpush1.msra.mxu0 0.0
  %787 = vmatprep.subr.mxu0 0.0
  %788 = vmatpush1.msra.mxu0 0.0
  %789 = vmatprep.subr.mxu0 0.0
  %790 = vmatpush1.msra.mxu0 0.0
  %791 = vmatprep.subr.mxu0 0.0
  %792 = vmatpush1.msra.mxu0 0.0
  %793 = vmatprep.subr.mxu0 0.0
  %794 = vmatpush1.msra.mxu0 0.0
  %795 = vmatprep.mubr.f32.mxu0 0.0
  %796 = vmatmul.mubr.f32.gmra.mrb[0].mxu0 %v727
  %v797 = vpop.f32.mrb[0].mxu0
  %v798 = vadd.f32 0.0, %v797
  %v799 = vpop.f32.mrb[0].mxu0
  %v800 = vadd.f32 0.0, %v799
  %801 = vdwg.mxu0
  %802 = vmatprep.subr.mxu0 0.0
  %803 = vmatpush1.msra.mxu0 %v343
  %804 = vmatprep.subr.mxu0 0.0
  %805 = vmatpush1.msra.mxu0 %v346
  %806 = vmatprep.subr.mxu0 0.0
  %807 = vmatpush1.msra.mxu0 %v349
  %808 = vmatprep.subr.mxu0 0.0
  %809 = vmatpush1.msra.mxu0 %v352
  %810 = vmatprep.subr.mxu0 0.0
  %811 = vmatpush1.msra.mxu0 %v355
  %812 = vmatprep.subr.mxu0 0.0
  %813 = vmatpush1.msra.mxu0 %v358
  %814 = vmatprep.subr.mxu0 0.0
  %815 = vmatpush1.msra.mxu0 %v361
  %816 = vmatprep.subr.mxu0 0.0
  %817 = vmatpush1.msra.mxu0 %v364
  %818 = vmatprep.subr.mxu0 0.0
  %819 = vmatpush1.msra.mxu0 %v367
  %820 = vmatprep.subr.mxu0 0.0
  %821 = vmatpush1.msra.mxu0 %v370
  %822 = vmatprep.subr.mxu0 0.0
  %823 = vmatpush1.msra.mxu0 %v373
  %824 = vmatprep.subr.mxu0 0.0
  %825 = vmatpush1.msra.mxu0 %v376
  %826 = vmatprep.subr.mxu0 0.0
  %827 = vmatpush1.msra.mxu0 %v379
  %828 = vmatprep.subr.mxu0 0.0
  %829 = vmatpush1.msra.mxu0 %v382
  %830 = vmatprep.subr.mxu0 0.0
  %831 = vmatpush1.msra.mxu0 %v385
  %832 = vmatprep.subr.mxu0 0.0
  %833 = vmatpush1.msra.mxu0 %v388
  %834 = vmatprep.subr.mxu0 0.0
  %835 = vmatpush1.msra.mxu0 0.0
  %836 = vmatprep.subr.mxu0 0.0
  %837 = vmatpush1.msra.mxu0 0.0
  %838 = vmatprep.subr.mxu0 0.0
  %839 = vmatpush1.msra.mxu0 0.0
  %840 = vmatprep.subr.mxu0 0.0
  %841 = vmatpush1.msra.mxu0 0.0
  %842 = vmatprep.subr.mxu0 0.0
  %843 = vmatpush1.msra.mxu0 0.0
  %844 = vmatprep.subr.mxu0 0.0
  %845 = vmatpush1.msra.mxu0 0.0
  %846 = vmatprep.subr.mxu0 0.0
  %847 = vmatpush1.msra.mxu0 0.0
  %848 = vmatprep.subr.mxu0 0.0
  %849 = vmatpush1.msra.mxu0 0.0
  %850 = vmatprep.subr.mxu0 0.0
  %851 = vmatpush1.msra.mxu0 0.0
  %852 = vmatprep.subr.mxu0 0.0
  %853 = vmatpush1.msra.mxu0 0.0
  %854 = vmatprep.subr.mxu0 0.0
  %855 = vmatpush1.msra.mxu0 0.0
  %856 = vmatprep.subr.mxu0 0.0
  %857 = vmatpush1.msra.mxu0 0.0
  %858 = vmatprep.subr.mxu0 0.0
  %859 = vmatpush1.msra.mxu0 0.0
  %860 = vmatprep.subr.mxu0 0.0
  %861 = vmatpush1.msra.mxu0 0.0
  %862 = vmatprep.subr.mxu0 0.0
  %863 = vmatpush1.msra.mxu0 0.0
  %864 = vmatprep.subr.mxu0 0.0
  %865 = vmatpush1.msra.mxu0 0.0
  %866 = vmatprep.mubr.f32.mxu0 0.0
  %867 = vmatmul.mubr.f32.gmra.mrb[0].mxu0 %v727
  %v868 = vpop.f32.mrb[0].mxu0
  %v869 = vadd.f32 0.0, %v868
  %v870 = vpop.f32.mrb[0].mxu0
  %871 = vdwg.mxu0
  %v872 = vadd.f32 %v728, %v798
  %v873 = vxor.u32 %v872, 2147483648
  %v874 = vmul.f32 %v873, 1.442695
  %v875 = vpow.pop %v874
  %v876 = vadd.f32 %v875, 1.0
  %v877 = vrcp.pop %v876
  %v878 = vmul.f32 1.0, %v877
  %v879 = vadd.f32 %v729, %v800
  %v880 = vxor.u32 %v879, 2147483648
  %v881 = vmul.f32 %v880, 1.442695
  %v882 = vpow.pop %v881
  %v883 = vadd.f32 %v882, 1.0
  %v884 = vrcp.pop %v883
  %v885 = vmul.f32 1.0, %v884
  %v886 = vadd.f32 %v869, %v394
  %v887 = vmul.f32 %v878, %v886
  %v888 = vadd.f32 %v730, %v887
  %v889 = vtanh.pop %v888
  %v890 = vsub.f32 1.0, %v885
  %v891 = vmul.f32 %v890, %v889
  %v892 = vmul.f32 %v885, %v727
  %v893 = vadd.f32 %v891, %v892
  %v894 = vld [vmem:[#allocation2 + $0x48] sm:$0xff]
  %v895 = vld [vmem:[#allocation2 + $0x50] sm:$0xff]
  %v896 = vld [vmem:[#allocation2 + $0x58] sm:$0xff]
  %897 = vmatprep.subr.mxu0 %v342
  %898 = vmatpush1.msra.mxu0 %v341
  %899 = vmatprep.subr.mxu0 %v345
  %900 = vmatpush1.msra.mxu0 %v344
  %901 = vmatprep.subr.mxu0 %v348
  %902 = vmatpush1.msra.mxu0 %v347
  %903 = vmatprep.subr.mxu0 %v351
  %904 = vmatpush1.msra.mxu0 %v350
  %905 = vmatprep.subr.mxu0 %v354
  %906 = vmatpush1.msra.mxu0 %v353
  %907 = vmatprep.subr.mxu0 %v357
  %908 = vmatpush1.msra.mxu0 %v356
  %909 = vmatprep.subr.mxu0 %v360
  %910 = vmatpush1.msra.mxu0 %v359
  %911 = vmatprep.subr.mxu0 %v363
  %912 = vmatpush1.msra.mxu0 %v362
  %913 = vmatprep.subr.mxu0 %v366
  %914 = vmatpush1.msra.mxu0 %v365
  %915 = vmatprep.subr.mxu0 %v369
  %916 = vmatpush1.msra.mxu0 %v368
  %917 = vmatprep.subr.mxu0 %v372
  %918 = vmatpush1.msra.mxu0 %v371
  %919 = vmatprep.subr.mxu0 %v375
  %920 = vmatpush1.msra.mxu0 %v374
  %921 = vmatprep.subr.mxu0 %v378
  %922 = vmatpush1.msra.mxu0 %v377
  %923 = vmatprep.subr.mxu0 %v381
  %924 = vmatpush1.msra.mxu0 %v380
  %925 = vmatprep.subr.mxu0 %v384
  %926 = vmatpush1.msra.mxu0 %v383
  %927 = vmatprep.subr.mxu0 %v387
  %928 = vmatpush1.msra.mxu0 %v386
  %929 = vmatprep.subr.mxu0 0.0
  %930 = vmatpush1.msra.mxu0 0.0
  %931 = vmatprep.subr.mxu0 0.0
  %932 = vmatpush1.msra.mxu0 0.0
  %933 = vmatprep.subr.mxu0 0.0
  %934 = vmatpush1.msra.mxu0 0.0
  %935 = vmatprep.subr.mxu0 0.0
  %936 = vmatpush1.msra.mxu0 0.0
  %937 = vmatprep.subr.mxu0 0.0
  %938 = vmatpush1.msra.mxu0 0.0
  %939 = vmatprep.subr.mxu0 0.0
  %940 = vmatpush1.msra.mxu0 0.0
  %941 = vmatprep.subr.mxu0 0.0
  %942 = vmatpush1.msra.mxu0 0.0
  %943 = vmatprep.subr.mxu0 0.0
  %944 = vmatpush1.msra.mxu0 0.0
  %945 = vmatprep.subr.mxu0 0.0
  %946 = vmatpush1.msra.mxu0 0.0
  %947 = vmatprep.subr.mxu0 0.0
  %948 = vmatpush1.msra.mxu0 0.0
  %949 = vmatprep.subr.mxu0 0.0
  %950 = vmatpush1.msra.mxu0 0.0
  %951 = vmatprep.subr.mxu0 0.0
  %952 = vmatpush1.msra.mxu0 0.0
  %953 = vmatprep.subr.mxu0 0.0
  %954 = vmatpush1.msra.mxu0 0.0
  %955 = vmatprep.subr.mxu0 0.0
  %956 = vmatpush1.msra.mxu0 0.0
  %957 = vmatprep.subr.mxu0 0.0
  %958 = vmatpush1.msra.mxu0 0.0
  %959 = vmatprep.subr.mxu0 0.0
  %960 = vmatpush1.msra.mxu0 0.0
  %961 = vmatprep.mubr.f32.mxu0 0.0
  %962 = vmatmul.mubr.f32.gmra.mrb[0].mxu0 %v893
  %v963 = vpop.f32.mrb[0].mxu0
  %v964 = vadd.f32 0.0, %v963
  %v965 = vpop.f32.mrb[0].mxu0
  %v966 = vadd.f32 0.0, %v965
  %967 = vdwg.mxu0
  %968 = vmatprep.subr.mxu0 0.0
  %969 = vmatpush1.msra.mxu0 %v343
  %970 = vmatprep.subr.mxu0 0.0
  %971 = vmatpush1.msra.mxu0 %v346
  %972 = vmatprep.subr.mxu0 0.0
  %973 = vmatpush1.msra.mxu0 %v349
  %974 = vmatprep.subr.mxu0 0.0
  %975 = vmatpush1.msra.mxu0 %v352
  %976 = vmatprep.subr.mxu0 0.0
  %977 = vmatpush1.msra.mxu0 %v355
  %978 = vmatprep.subr.mxu0 0.0
  %979 = vmatpush1.msra.mxu0 %v358
  %980 = vmatprep.subr.mxu0 0.0
  %981 = vmatpush1.msra.mxu0 %v361
  %982 = vmatprep.subr.mxu0 0.0
  %983 = vmatpush1.msra.mxu0 %v364
  %984 = vmatprep.subr.mxu0 0.0
  %985 = vmatpush1.msra.mxu0 %v367
  %986 = vmatprep.subr.mxu0 0.0
  %987 = vmatpush1.msra.mxu0 %v370
  %988 = vmatprep.subr.mxu0 0.0
  %989 = vmatpush1.msra.mxu0 %v373
  %990 = vmatprep.subr.mxu0 0.0
  %991 = vmatpush1.msra.mxu0 %v376
  %992 = vmatprep.subr.mxu0 0.0
  %993 = vmatpush1.msra.mxu0 %v379
  %994 = vmatprep.subr.mxu0 0.0
  %995 = vmatpush1.msra.mxu0 %v382
  %996 = vmatprep.subr.mxu0 0.0
  %997 = vmatpush1.msra.mxu0 %v385
  %998 = vmatprep.subr.mxu0 0.0
  %999 = vmatpush1.msra.mxu0 %v388
  %1000 = vmatprep.subr.mxu0 0.0
  %1001 = vmatpush1.msra.mxu0 0.0
  %1002 = vmatprep.subr.mxu0 0.0
  %1003 = vmatpush1.msra.mxu0 0.0
  %1004 = vmatprep.subr.mxu0 0.0
  %1005 = vmatpush1.msra.mxu0 0.0
  %1006 = vmatprep.subr.mxu0 0.0
  %1007 = vmatpush1.msra.mxu0 0.0
  %1008 = vmatprep.subr.mxu0 0.0
  %1009 = vmatpush1.msra.mxu0 0.0
  %1010 = vmatprep.subr.mxu0 0.0
  %1011 = vmatpush1.msra.mxu0 0.0
  %1012 = vmatprep.subr.mxu0 0.0
  %1013 = vmatpush1.msra.mxu0 0.0
  %1014 = vmatprep.subr.mxu0 0.0
  %1015 = vmatpush1.msra.mxu0 0.0
  %1016 = vmatprep.subr.mxu0 0.0
  %1017 = vmatpush1.msra.mxu0 0.0
  %1018 = vmatprep.subr.mxu0 0.0
  %1019 = vmatpush1.msra.mxu0 0.0
  %1020 = vmatprep.subr.mxu0 0.0
  %1021 = vmatpush1.msra.mxu0 0.0
  %1022 = vmatprep.subr.mxu0 0.0
  %1023 = vmatpush1.msra.mxu0 0.0
  %1024 = vmatprep.subr.mxu0 0.0
  %1025 = vmatpush1.msra.mxu0 0.0
  %1026 = vmatprep.subr.mxu0 0.0
  %1027 = vmatpush1.msra.mxu0 0.0
  %1028 = vmatprep.subr.mxu0 0.0
  %1029 = vmatpush1.msra.mxu0 0.0
  %1030 = vmatprep.subr.mxu0 0.0
  %1031 = vmatpush1.msra.mxu0 0.0
  %1032 = vmatprep.mubr.f32.mxu0 0.0
  %1033 = vmatmul.mubr.f32.gmra.mrb[0].mxu0 %v893
  %v1034 = vpop.f32.mrb[0].mxu0
  %v1035 = vadd.f32 0.0, %v1034
  %v1036 = vpop.f32.mrb[0].mxu0
  %1037 = vdwg.mxu0
  %v1038 = vadd.f32 %v894, %v964
  %v1039 = vxor.u32 %v1038, 2147483648
  %v1040 = vmul.f32 %v1039, 1.442695
  %v1041 = vpow.pop %v1040
  %v1042 = vadd.f32 %v1041, 1.0
  %v1043 = vrcp.pop %v1042
  %v1044 = vmul.f32 1.0, %v1043
  %v1045 = vadd.f32 %v895, %v966
  %v1046 = vxor.u32 %v1045, 2147483648
  %v1047 = vmul.f32 %v1046, 1.442695
  %v1048 = vpow.pop %v1047
  %v1049 = vadd.f32 %v1048, 1.0
  %v1050 = vrcp.pop %v1049
  %v1051 = vmul.f32 1.0, %v1050
  %v1052 = vadd.f32 %v1035, %v394
  %v1053 = vmul.f32 %v1044, %v1052
  %v1054 = vadd.f32 %v896, %v1053
  %v1055 = vtanh.pop %v1054
  %v1056 = vsub.f32 1.0, %v1051
  %v1057 = vmul.f32 %v1056, %v1055
  %v1058 = vmul.f32 %v1051, %v893
  %v1059 = vadd.f32 %v1057, %v1058
  %v1060 = vld [vmem:[#allocation2 + $0x60] sm:$0xff]
  %v1061 = vld [vmem:[#allocation2 + $0x68] sm:$0xff]
  %v1062 = vld [vmem:[#allocation2 + $0x70] sm:$0xff]
  %1063 = vmatprep.subr.mxu0 %v342
  %1064 = vmatpush1.msra.mxu0 %v341
  %1065 = vmatprep.subr.mxu0 %v345
  %1066 = vmatpush1.msra.mxu0 %v344
  %1067 = vmatprep.subr.mxu0 %v348
  %1068 = vmatpush1.msra.mxu0 %v347
  %1069 = vmatprep.subr.mxu0 %v351
  %1070 = vmatpush1.msra.mxu0 %v350
  %1071 = vmatprep.subr.mxu0 %v354
  %1072 = vmatpush1.msra.mxu0 %v353
  %1073 = vmatprep.subr.mxu0 %v357
  %1074 = vmatpush1.msra.mxu0 %v356
  %1075 = vmatprep.subr.mxu0 %v360
  %1076 = vmatpush1.msra.mxu0 %v359
  %1077 = vmatprep.subr.mxu0 %v363
  %1078 = vmatpush1.msra.mxu0 %v362
  %1079 = vmatprep.subr.mxu0 %v366
  %1080 = vmatpush1.msra.mxu0 %v365
  %1081 = vmatprep.subr.mxu0 %v369
  %1082 = vmatpush1.msra.mxu0 %v368
  %1083 = vmatprep.subr.mxu0 %v372
  %1084 = vmatpush1.msra.mxu0 %v371
  %1085 = vmatprep.subr.mxu0 %v375
  %1086 = vmatpush1.msra.mxu0 %v374
  %1087 = vmatprep.subr.mxu0 %v378
  %1088 = vmatpush1.msra.mxu0 %v377
  %1089 = vmatprep.subr.mxu0 %v381
  %1090 = vmatpush1.msra.mxu0 %v380
  %1091 = vmatprep.subr.mxu0 %v384
  %1092 = vmatpush1.msra.mxu0 %v383
  %1093 = vmatprep.subr.mxu0 %v387
  %1094 = vmatpush1.msra.mxu0 %v386
  %1095 = vmatprep.subr.mxu0 0.0
  %1096 = vmatpush1.msra.mxu0 0.0
  %1097 = vmatprep.subr.mxu0 0.0
  %1098 = vmatpush1.msra.mxu0 0.0
  %1099 = vmatprep.subr.mxu0 0.0
  %1100 = vmatpush1.msra.mxu0 0.0
  %1101 = vmatprep.subr.mxu0 0.0
  %1102 = vmatpush1.msra.mxu0 0.0
  %1103 = vmatprep.subr.mxu0 0.0
  %1104 = vmatpush1.msra.mxu0 0.0
  %1105 = vmatprep.subr.mxu0 0.0
  %1106 = vmatpush1.msra.mxu0 0.0
  %1107 = vmatprep.subr.mxu0 0.0
  %1108 = vmatpush1.msra.mxu0 0.0
  %1109 = vmatprep.subr.mxu0 0.0
  %1110 = vmatpush1.msra.mxu0 0.0
  %1111 = vmatprep.subr.mxu0 0.0
  %1112 = vmatpush1.msra.mxu0 0.0
  %1113 = vmatprep.subr.mxu0 0.0
  %1114 = vmatpush1.msra.mxu0 0.0
  %1115 = vmatprep.subr.mxu0 0.0
  %1116 = vmatpush1.msra.mxu0 0.0
  %1117 = vmatprep.subr.mxu0 0.0
  %1118 = vmatpush1.msra.mxu0 0.0
  %1119 = vmatprep.subr.mxu0 0.0
  %1120 = vmatpush1.msra.mxu0 0.0
  %1121 = vmatprep.subr.mxu0 0.0
  %1122 = vmatpush1.msra.mxu0 0.0
  %1123 = vmatprep.subr.mxu0 0.0
  %1124 = vmatpush1.msra.mxu0 0.0
  %1125 = vmatprep.subr.mxu0 0.0
  %1126 = vmatpush1.msra.mxu0 0.0
  %1127 = vmatprep.mubr.f32.mxu0 0.0
  %1128 = vmatmul.mubr.f32.gmra.mrb[0].mxu0 %v1059
  %v1129 = vpop.f32.mrb[0].mxu0
  %v1130 = vadd.f32 0.0, %v1129
  %v1131 = vpop.f32.mrb[0].mxu0
  %v1132 = vadd.f32 0.0, %v1131
  %1133 = vdwg.mxu0
  %1134 = vmatprep.subr.mxu0 0.0
  %1135 = vmatpush1.msra.mxu0 %v343
  %1136 = vmatprep.subr.mxu0 0.0
  %1137 = vmatpush1.msra.mxu0 %v346
  %1138 = vmatprep.subr.mxu0 0.0
  %1139 = vmatpush1.msra.mxu0 %v349
  %1140 = vmatprep.subr.mxu0 0.0
  %1141 = vmatpush1.msra.mxu0 %v352
  %1142 = vmatprep.subr.mxu0 0.0
  %1143 = vmatpush1.msra.mxu0 %v355
  %1144 = vmatprep.subr.mxu0 0.0
  %1145 = vmatpush1.msra.mxu0 %v358
  %1146 = vmatprep.subr.mxu0 0.0
  %1147 = vmatpush1.msra.mxu0 %v361
  %1148 = vmatprep.subr.mxu0 0.0
  %1149 = vmatpush1.msra.mxu0 %v364
  %1150 = vmatprep.subr.mxu0 0.0
  %1151 = vmatpush1.msra.mxu0 %v367
  %1152 = vmatprep.subr.mxu0 0.0
  %1153 = vmatpush1.msra.mxu0 %v370
  %1154 = vmatprep.subr.mxu0 0.0
  %1155 = vmatpush1.msra.mxu0 %v373
  %1156 = vmatprep.subr.mxu0 0.0
  %1157 = vmatpush1.msra.mxu0 %v376
  %1158 = vmatprep.subr.mxu0 0.0
  %1159 = vmatpush1.msra.mxu0 %v379
  %1160 = vmatprep.subr.mxu0 0.0
  %1161 = vmatpush1.msra.mxu0 %v382
  %1162 = vmatprep.subr.mxu0 0.0
  %1163 = vmatpush1.msra.mxu0 %v385
  %1164 = vmatprep.subr.mxu0 0.0
  %1165 = vmatpush1.msra.mxu0 %v388
  %1166 = vmatprep.subr.mxu0 0.0
  %1167 = vmatpush1.msra.mxu0 0.0
  %1168 = vmatprep.subr.mxu0 0.0
  %1169 = vmatpush1.msra.mxu0 0.0
  %1170 = vmatprep.subr.mxu0 0.0
  %1171 = vmatpush1.msra.mxu0 0.0
  %1172 = vmatprep.subr.mxu0 0.0
  %1173 = vmatpush1.msra.mxu0 0.0
  %1174 = vmatprep.subr.mxu0 0.0
  %1175 = vmatpush1.msra.mxu0 0.0
  %1176 = vmatprep.subr.mxu0 0.0
  %1177 = vmatpush1.msra.mxu0 0.0
  %1178 = vmatprep.subr.mxu0 0.0
  %1179 = vmatpush1.msra.mxu0 0.0
  %1180 = vmatprep.subr.mxu0 0.0
  %1181 = vmatpush1.msra.mxu0 0.0
  %1182 = vmatprep.subr.mxu0 0.0
  %1183 = vmatpush1.msra.mxu0 0.0
  %1184 = vmatprep.subr.mxu0 0.0
  %1185 = vmatpush1.msra.mxu0 0.0
  %1186 = vmatprep.subr.mxu0 0.0
  %1187 = vmatpush1.msra.mxu0 0.0
  %1188 = vmatprep.subr.mxu0 0.0
  %1189 = vmatpush1.msra.mxu0 0.0
  %1190 = vmatprep.subr.mxu0 0.0
  %1191 = vmatpush1.msra.mxu0 0.0
  %1192 = vmatprep.subr.mxu0 0.0
  %1193 = vmatpush1.msra.mxu0 0.0
  %1194 = vmatprep.subr.mxu0 0.0
  %1195 = vmatpush1.msra.mxu0 0.0
  %1196 = vmatprep.subr.mxu0 0.0
  %1197 = vmatpush1.msra.mxu0 0.0
  %1198 = vmatprep.mubr.f32.mxu0 0.0
  %1199 = vmatmul.mubr.f32.gmra.mrb[0].mxu0 %v1059
  %v1200 = vpop.f32.mrb[0].mxu0
  %v1201 = vadd.f32 0.0, %v1200
  %v1202 = vpop.f32.mrb[0].mxu0
  %1203 = vdwg.mxu0
  %v1204 = vadd.f32 %v1060, %v1130
  %v1205 = vxor.u32 %v1204, 2147483648
  %v1206 = vmul.f32 %v1205, 1.442695
  %v1207 = vpow.pop %v1206
  %v1208 = vadd.f32 %v1207, 1.0
  %v1209 = vrcp.pop %v1208
  %v1210 = vmul.f32 1.0, %v1209
  %v1211 = vadd.f32 %v1061, %v1132
  %v1212 = vxor.u32 %v1211, 2147483648
  %v1213 = vmul.f32 %v1212, 1.442695
  %v1214 = vpow.pop %v1213
  %v1215 = vadd.f32 %v1214, 1.0
  %v1216 = vrcp.pop %v1215
  %v1217 = vmul.f32 1.0, %v1216
  %v1218 = vadd.f32 %v1201, %v394
  %v1219 = vmul.f32 %v1210, %v1218
  %v1220 = vadd.f32 %v1062, %v1219
  %v1221 = vtanh.pop %v1220
  %v1222 = vsub.f32 1.0, %v1217
  %v1223 = vmul.f32 %v1222, %v1221
  %v1224 = vmul.f32 %v1217, %v1059
  %v1225 = vadd.f32 %v1223, %v1224
  %v1226 = vld [vmem:[#allocation2 + $0x78] sm:$0xff]
  %v1227 = vld [vmem:[#allocation2 + $0x80] sm:$0xff]
  %v1228 = vld [vmem:[#allocation2 + $0x88] sm:$0xff]
  %1229 = vmatprep.subr.mxu0 %v342
  %1230 = vmatpush1.msra.mxu0 %v341
  %1231 = vmatprep.subr.mxu0 %v345
  %1232 = vmatpush1.msra.mxu0 %v344
  %1233 = vmatprep.subr.mxu0 %v348
  %1234 = vmatpush1.msra.mxu0 %v347
  %1235 = vmatprep.subr.mxu0 %v351
  %1236 = vmatpush1.msra.mxu0 %v350
  %1237 = vmatprep.subr.mxu0 %v354
  %1238 = vmatpush1.msra.mxu0 %v353
  %1239 = vmatprep.subr.mxu0 %v357
  %1240 = vmatpush1.msra.mxu0 %v356
  %1241 = vmatprep.subr.mxu0 %v360
  %1242 = vmatpush1.msra.mxu0 %v359
  %1243 = vmatprep.subr.mxu0 %v363
  %1244 = vmatpush1.msra.mxu0 %v362
  %1245 = vmatprep.subr.mxu0 %v366
  %1246 = vmatpush1.msra.mxu0 %v365
  %1247 = vmatprep.subr.mxu0 %v369
  %1248 = vmatpush1.msra.mxu0 %v368
  %1249 = vmatprep.subr.mxu0 %v372
  %1250 = vmatpush1.msra.mxu0 %v371
  %1251 = vmatprep.subr.mxu0 %v375
  %1252 = vmatpush1.msra.mxu0 %v374
  %1253 = vmatprep.subr.mxu0 %v378
  %1254 = vmatpush1.msra.mxu0 %v377
  %1255 = vmatprep.subr.mxu0 %v381
  %1256 = vmatpush1.msra.mxu0 %v380
  %1257 = vmatprep.subr.mxu0 %v384
  %1258 = vmatpush1.msra.mxu0 %v383
  %1259 = vmatprep.subr.mxu0 %v387
  %1260 = vmatpush1.msra.mxu0 %v386
  %1261 = vmatprep.subr.mxu0 0.0
  %1262 = vmatpush1.msra.mxu0 0.0
  %1263 = vmatprep.subr.mxu0 0.0
  %1264 = vmatpush1.msra.mxu0 0.0
  %1265 = vmatprep.subr.mxu0 0.0
  %1266 = vmatpush1.msra.mxu0 0.0
  %1267 = vmatprep.subr.mxu0 0.0
  %1268 = vmatpush1.msra.mxu0 0.0
  %1269 = vmatprep.subr.mxu0 0.0
  %1270 = vmatpush1.msra.mxu0 0.0
  %1271 = vmatprep.subr.mxu0 0.0
  %1272 = vmatpush1.msra.mxu0 0.0
  %1273 = vmatprep.subr.mxu0 0.0
  %1274 = vmatpush1.msra.mxu0 0.0
  %1275 = vmatprep.subr.mxu0 0.0
  %1276 = vmatpush1.msra.mxu0 0.0
  %1277 = vmatprep.subr.mxu0 0.0
  %1278 = vmatpush1.msra.mxu0 0.0
  %1279 = vmatprep.subr.mxu0 0.0
  %1280 = vmatpush1.msra.mxu0 0.0
  %1281 = vmatprep.subr.mxu0 0.0
  %1282 = vmatpush1.msra.mxu0 0.0
  %1283 = vmatprep.subr.mxu0 0.0
  %1284 = vmatpush1.msra.mxu0 0.0
  %1285 = vmatprep.subr.mxu0 0.0
  %1286 = vmatpush1.msra.mxu0 0.0
  %1287 = vmatprep.subr.mxu0 0.0
  %1288 = vmatpush1.msra.mxu0 0.0
  %1289 = vmatprep.subr.mxu0 0.0
  %1290 = vmatpush1.msra.mxu0 0.0
  %1291 = vmatprep.subr.mxu0 0.0
  %1292 = vmatpush1.msra.mxu0 0.0
  %1293 = vmatprep.mubr.f32.mxu0 0.0
  %1294 = vmatmul.mubr.f32.gmra.mrb[0].mxu0 %v1225
  %v1295 = vpop.f32.mrb[0].mxu0
  %v1296 = vadd.f32 0.0, %v1295
  %v1297 = vpop.f32.mrb[0].mxu0
  %v1298 = vadd.f32 0.0, %v1297
  %1299 = vdwg.mxu0
  %1300 = vmatprep.subr.mxu0 0.0
  %1301 = vmatpush1.msra.mxu0 %v343
  %1302 = vmatprep.subr.mxu0 0.0
  %1303 = vmatpush1.msra.mxu0 %v346
  %1304 = vmatprep.subr.mxu0 0.0
  %1305 = vmatpush1.msra.mxu0 %v349
  %1306 = vmatprep.subr.mxu0 0.0
  %1307 = vmatpush1.msra.mxu0 %v352
  %1308 = vmatprep.subr.mxu0 0.0
  %1309 = vmatpush1.msra.mxu0 %v355
  %1310 = vmatprep.subr.mxu0 0.0
  %1311 = vmatpush1.msra.mxu0 %v358
  %1312 = vmatprep.subr.mxu0 0.0
  %1313 = vmatpush1.msra.mxu0 %v361
  %1314 = vmatprep.subr.mxu0 0.0
  %1315 = vmatpush1.msra.mxu0 %v364
  %1316 = vmatprep.subr.mxu0 0.0
  %1317 = vmatpush1.msra.mxu0 %v367
  %1318 = vmatprep.subr.mxu0 0.0
  %1319 = vmatpush1.msra.mxu0 %v370
  %1320 = vmatprep.subr.mxu0 0.0
  %1321 = vmatpush1.msra.mxu0 %v373
  %1322 = vmatprep.subr.mxu0 0.0
  %1323 = vmatpush1.msra.mxu0 %v376
  %1324 = vmatprep.subr.mxu0 0.0
  %1325 = vmatpush1.msra.mxu0 %v379
  %1326 = vmatprep.subr.mxu0 0.0
  %1327 = vmatpush1.msra.mxu0 %v382
  %1328 = vmatprep.subr.mxu0 0.0
  %1329 = vmatpush1.msra.mxu0 %v385
  %1330 = vmatprep.subr.mxu0 0.0
  %1331 = vmatpush1.msra.mxu0 %v388
  %1332 = vmatprep.subr.mxu0 0.0
  %1333 = vmatpush1.msra.mxu0 0.0
  %1334 = vmatprep.subr.mxu0 0.0
  %1335 = vmatpush1.msra.mxu0 0.0
  %1336 = vmatprep.subr.mxu0 0.0
  %1337 = vmatpush1.msra.mxu0 0.0
  %1338 = vmatprep.subr.mxu0 0.0
  %1339 = vmatpush1.msra.mxu0 0.0
  %1340 = vmatprep.subr.mxu0 0.0
  %1341 = vmatpush1.msra.mxu0 0.0
  %1342 = vmatprep.subr.mxu0 0.0
  %1343 = vmatpush1.msra.mxu0 0.0
  %1344 = vmatprep.subr.mxu0 0.0
  %1345 = vmatpush1.msra.mxu0 0.0
  %1346 = vmatprep.subr.mxu0 0.0
  %1347 = vmatpush1.msra.mxu0 0.0
  %1348 = vmatprep.subr.mxu0 0.0
  %1349 = vmatpush1.msra.mxu0 0.0
  %1350 = vmatprep.subr.mxu0 0.0
  %1351 = vmatpush1.msra.mxu0 0.0
  %1352 = vmatprep.subr.mxu0 0.0
  %1353 = vmatpush1.msra.mxu0 0.0
  %1354 = vmatprep.subr.mxu0 0.0
  %1355 = vmatpush1.msra.mxu0 0.0
  %1356 = vmatprep.subr.mxu0 0.0
  %1357 = vmatpush1.msra.mxu0 0.0
  %1358 = vmatprep.subr.mxu0 0.0
  %1359 = vmatpush1.msra.mxu0 0.0
  %1360 = vmatprep.subr.mxu0 0.0
  %1361 = vmatpush1.msra.mxu0 0.0
  %1362 = vmatprep.subr.mxu0 0.0
  %1363 = vmatpush1.msra.mxu0 0.0
  %1364 = vmatprep.mubr.f32.mxu0 0.0
  %1365 = vmatmul.mubr.f32.gmra.mrb[0].mxu0 %v1225
  %v1366 = vpop.f32.mrb[0].mxu0
  %v1367 = vadd.f32 0.0, %v1366
  %v1368 = vpop.f32.mrb[0].mxu0
  %1369 = vdwg.mxu0
  %v1370 = vadd.f32 %v1226, %v1296
  %v1371 = vxor.u32 %v1370, 2147483648
  %v1372 = vmul.f32 %v1371, 1.442695
  %v1373 = vpow.pop %v1372
  %v1374 = vadd.f32 %v1373, 1.0
  %v1375 = vrcp.pop %v1374
  %v1376 = vmul.f32 1.0, %v1375
  %v1377 = vadd.f32 %v1227, %v1298
  %v1378 = vxor.u32 %v1377, 2147483648
  %v1379 = vmul.f32 %v1378, 1.442695
  %v1380 = vpow.pop %v1379
  %v1381 = vadd.f32 %v1380, 1.0
  %v1382 = vrcp.pop %v1381
  %v1383 = vmul.f32 1.0, %v1382
  %v1384 = vadd.f32 %v1367, %v394
  %v1385 = vmul.f32 %v1376, %v1384
  %v1386 = vadd.f32 %v1228, %v1385
  %v1387 = vtanh.pop %v1386
  %v1388 = vsub.f32 1.0, %v1383
  %v1389 = vmul.f32 %v1388, %v1387
  %v1390 = vmul.f32 %v1383, %v1225
  %v1391 = vadd.f32 %v1389, %v1390
  %v1392 = vld [vmem:[#allocation2 + $0x90] sm:$0xff]
  %v1393 = vld [vmem:[#allocation2 + $0x98] sm:$0xff]
  %v1394 = vld [vmem:[#allocation2 + $0xa0] sm:$0xff]
  %1395 = vmatprep.subr.mxu0 %v342
  %1396 = vmatpush1.msra.mxu0 %v341
  %1397 = vmatprep.subr.mxu0 %v345
  %1398 = vmatpush1.msra.mxu0 %v344
  %1399 = vmatprep.subr.mxu0 %v348
  %1400 = vmatpush1.msra.mxu0 %v347
  %1401 = vmatprep.subr.mxu0 %v351
  %1402 = vmatpush1.msra.mxu0 %v350
  %1403 = vmatprep.subr.mxu0 %v354
  %1404 = vmatpush1.msra.mxu0 %v353
  %1405 = vmatprep.subr.mxu0 %v357
  %1406 = vmatpush1.msra.mxu0 %v356
  %1407 = vmatprep.subr.mxu0 %v360
  %1408 = vmatpush1.msra.mxu0 %v359
  %1409 = vmatprep.subr.mxu0 %v363
  %1410 = vmatpush1.msra.mxu0 %v362
  %1411 = vmatprep.subr.mxu0 %v366
  %1412 = vmatpush1.msra.mxu0 %v365
  %1413 = vmatprep.subr.mxu0 %v369
  %1414 = vmatpush1.msra.mxu0 %v368
  %1415 = vmatprep.subr.mxu0 %v372
  %1416 = vmatpush1.msra.mxu0 %v371
  %1417 = vmatprep.subr.mxu0 %v375
  %1418 = vmatpush1.msra.mxu0 %v374
  %1419 = vmatprep.subr.mxu0 %v378
  %1420 = vmatpush1.msra.mxu0 %v377
  %1421 = vmatprep.subr.mxu0 %v381
  %1422 = vmatpush1.msra.mxu0 %v380
  %1423 = vmatprep.subr.mxu0 %v384
  %1424 = vmatpush1.msra.mxu0 %v383
  %1425 = vmatprep.subr.mxu0 %v387
  %1426 = vmatpush1.msra.mxu0 %v386
  %1427 = vmatprep.subr.mxu0 0.0
  %1428 = vmatpush1.msra.mxu0 0.0
  %1429 = vmatprep.subr.mxu0 0.0
  %1430 = vmatpush1.msra.mxu0 0.0
  %1431 = vmatprep.subr.mxu0 0.0
  %1432 = vmatpush1.msra.mxu0 0.0
  %1433 = vmatprep.subr.mxu0 0.0
  %1434 = vmatpush1.msra.mxu0 0.0
  %1435 = vmatprep.subr.mxu0 0.0
  %1436 = vmatpush1.msra.mxu0 0.0
  %1437 = vmatprep.subr.mxu0 0.0
  %1438 = vmatpush1.msra.mxu0 0.0
  %1439 = vmatprep.subr.mxu0 0.0
  %1440 = vmatpush1.msra.mxu0 0.0
  %1441 = vmatprep.subr.mxu0 0.0
  %1442 = vmatpush1.msra.mxu0 0.0
  %1443 = vmatprep.subr.mxu0 0.0
  %1444 = vmatpush1.msra.mxu0 0.0
  %1445 = vmatprep.subr.mxu0 0.0
  %1446 = vmatpush1.msra.mxu0 0.0
  %1447 = vmatprep.subr.mxu0 0.0
  %1448 = vmatpush1.msra.mxu0 0.0
  %1449 = vmatprep.subr.mxu0 0.0
  %1450 = vmatpush1.msra.mxu0 0.0
  %1451 = vmatprep.subr.mxu0 0.0
  %1452 = vmatpush1.msra.mxu0 0.0
  %1453 = vmatprep.subr.mxu0 0.0
  %1454 = vmatpush1.msra.mxu0 0.0
  %1455 = vmatprep.subr.mxu0 0.0
  %1456 = vmatpush1.msra.mxu0 0.0
  %1457 = vmatprep.subr.mxu0 0.0
  %1458 = vmatpush1.msra.mxu0 0.0
  %1459 = vmatprep.mubr.f32.mxu0 0.0
  %1460 = vmatmul.mubr.f32.gmra.mrb[0].mxu0 %v1391
  %v1461 = vpop.f32.mrb[0].mxu0
  %v1462 = vadd.f32 0.0, %v1461
  %v1463 = vpop.f32.mrb[0].mxu0
  %v1464 = vadd.f32 0.0, %v1463
  %1465 = vdwg.mxu0
  %1466 = vmatprep.subr.mxu0 0.0
  %1467 = vmatpush1.msra.mxu0 %v343
  %1468 = vmatprep.subr.mxu0 0.0
  %1469 = vmatpush1.msra.mxu0 %v346
  %1470 = vmatprep.subr.mxu0 0.0
  %1471 = vmatpush1.msra.mxu0 %v349
  %1472 = vmatprep.subr.mxu0 0.0
  %1473 = vmatpush1.msra.mxu0 %v352
  %1474 = vmatprep.subr.mxu0 0.0
  %1475 = vmatpush1.msra.mxu0 %v355
  %1476 = vmatprep.subr.mxu0 0.0
  %1477 = vmatpush1.msra.mxu0 %v358
  %1478 = vmatprep.subr.mxu0 0.0
  %1479 = vmatpush1.msra.mxu0 %v361
  %1480 = vmatprep.subr.mxu0 0.0
  %1481 = vmatpush1.msra.mxu0 %v364
  %1482 = vmatprep.subr.mxu0 0.0
  %1483 = vmatpush1.msra.mxu0 %v367
  %1484 = vmatprep.subr.mxu0 0.0
  %1485 = vmatpush1.msra.mxu0 %v370
  %1486 = vmatprep.subr.mxu0 0.0
  %1487 = vmatpush1.msra.mxu0 %v373
  %1488 = vmatprep.subr.mxu0 0.0
  %1489 = vmatpush1.msra.mxu0 %v376
  %1490 = vmatprep.subr.mxu0 0.0
  %1491 = vmatpush1.msra.mxu0 %v379
  %1492 = vmatprep.subr.mxu0 0.0
  %1493 = vmatpush1.msra.mxu0 %v382
  %1494 = vmatprep.subr.mxu0 0.0
  %1495 = vmatpush1.msra.mxu0 %v385
  %1496 = vmatprep.subr.mxu0 0.0
  %1497 = vmatpush1.msra.mxu0 %v388
  %1498 = vmatprep.subr.mxu0 0.0
  %1499 = vmatpush1.msra.mxu0 0.0
  %1500 = vmatprep.subr.mxu0 0.0
  %1501 = vmatpush1.msra.mxu0 0.0
  %1502 = vmatprep.subr.mxu0 0.0
  %1503 = vmatpush1.msra.mxu0 0.0
  %1504 = vmatprep.subr.mxu0 0.0
  %1505 = vmatpush1.msra.mxu0 0.0
  %1506 = vmatprep.subr.mxu0 0.0
  %1507 = vmatpush1.msra.mxu0 0.0
  %1508 = vmatprep.subr.mxu0 0.0
  %1509 = vmatpush1.msra.mxu0 0.0
  %1510 = vmatprep.subr.mxu0 0.0
  %1511 = vmatpush1.msra.mxu0 0.0
  %1512 = vmatprep.subr.mxu0 0.0
  %1513 = vmatpush1.msra.mxu0 0.0
  %1514 = vmatprep.subr.mxu0 0.0
  %1515 = vmatpush1.msra.mxu0 0.0
  %1516 = vmatprep.subr.mxu0 0.0
  %1517 = vmatpush1.msra.mxu0 0.0
  %1518 = vmatprep.subr.mxu0 0.0
  %1519 = vmatpush1.msra.mxu0 0.0
  %1520 = vmatprep.subr.mxu0 0.0
  %1521 = vmatpush1.msra.mxu0 0.0
  %1522 = vmatprep.subr.mxu0 0.0
  %1523 = vmatpush1.msra.mxu0 0.0
  %1524 = vmatprep.subr.mxu0 0.0
  %1525 = vmatpush1.msra.mxu0 0.0
  %1526 = vmatprep.subr.mxu0 0.0
  %1527 = vmatpush1.msra.mxu0 0.0
  %1528 = vmatprep.subr.mxu0 0.0
  %1529 = vmatpush1.msra.mxu0 0.0
  %1530 = vmatprep.mubr.f32.mxu0 0.0
  %1531 = vmatmul.mubr.f32.gmra.mrb[0].mxu0 %v1391
  %v1532 = vpop.f32.mrb[0].mxu0
  %v1533 = vadd.f32 0.0, %v1532
  %v1534 = vpop.f32.mrb[0].mxu0
  %1535 = vdwg.mxu0
  %v1536 = vadd.f32 %v1392, %v1462
  %v1537 = vxor.u32 %v1536, 2147483648
  %v1538 = vmul.f32 %v1537, 1.442695
  %v1539 = vpow.pop %v1538
  %v1540 = vadd.f32 %v1539, 1.0
  %v1541 = vrcp.pop %v1540
  %v1542 = vmul.f32 1.0, %v1541
  %v1543 = vadd.f32 %v1393, %v1464
  %v1544 = vxor.u32 %v1543, 2147483648
  %v1545 = vmul.f32 %v1544, 1.442695
  %v1546 = vpow.pop %v1545
  %v1547 = vadd.f32 %v1546, 1.0
  %v1548 = vrcp.pop %v1547
  %v1549 = vmul.f32 1.0, %v1548
  %v1550 = vadd.f32 %v1533, %v394
  %v1551 = vmul.f32 %v1542, %v1550
  %v1552 = vadd.f32 %v1394, %v1551
  %v1553 = vtanh.pop %v1552
  %v1554 = vsub.f32 1.0, %v1549
  %v1555 = vmul.f32 %v1554, %v1553
  %v1556 = vmul.f32 %v1549, %v1391
  %v1557 = vadd.f32 %v1555, %v1556
  %v1558 = vld [vmem:[#allocation2 + $0xa8] sm:$0xff]
  %v1559 = vld [vmem:[#allocation2 + $0xb0] sm:$0xff]
  %v1560 = vld [vmem:[#allocation2 + $0xb8] sm:$0xff]
  %1561 = vmatprep.subr.mxu0 %v342
  %1562 = vmatpush1.msra.mxu0 %v341
  %1563 = vmatprep.subr.mxu0 %v345
  %1564 = vmatpush1.msra.mxu0 %v344
  %1565 = vmatprep.subr.mxu0 %v348
  %1566 = vmatpush1.msra.mxu0 %v347
  %1567 = vmatprep.subr.mxu0 %v351
  %1568 = vmatpush1.msra.mxu0 %v350
  %1569 = vmatprep.subr.mxu0 %v354
  %1570 = vmatpush1.msra.mxu0 %v353
  %1571 = vmatprep.subr.mxu0 %v357
  %1572 = vmatpush1.msra.mxu0 %v356
  %1573 = vmatprep.subr.mxu0 %v360
  %1574 = vmatpush1.msra.mxu0 %v359
  %1575 = vmatprep.subr.mxu0 %v363
  %1576 = vmatpush1.msra.mxu0 %v362
  %1577 = vmatprep.subr.mxu0 %v366
  %1578 = vmatpush1.msra.mxu0 %v365
  %1579 = vmatprep.subr.mxu0 %v369
  %1580 = vmatpush1.msra.mxu0 %v368
  %1581 = vmatprep.subr.mxu0 %v372
  %1582 = vmatpush1.msra.mxu0 %v371
  %1583 = vmatprep.subr.mxu0 %v375
  %1584 = vmatpush1.msra.mxu0 %v374
  %1585 = vmatprep.subr.mxu0 %v378
  %1586 = vmatpush1.msra.mxu0 %v377
  %1587 = vmatprep.subr.mxu0 %v381
  %1588 = vmatpush1.msra.mxu0 %v380
  %1589 = vmatprep.subr.mxu0 %v384
  %1590 = vmatpush1.msra.mxu0 %v383
  %1591 = vmatprep.subr.mxu0 %v387
  %1592 = vmatpush1.msra.mxu0 %v386
  %1593 = vmatprep.subr.mxu0 0.0
  %1594 = vmatpush1.msra.mxu0 0.0
  %1595 = vmatprep.subr.mxu0 0.0
  %1596 = vmatpush1.msra.mxu0 0.0
  %1597 = vmatprep.subr.mxu0 0.0
  %1598 = vmatpush1.msra.mxu0 0.0
  %1599 = vmatprep.subr.mxu0 0.0
  %1600 = vmatpush1.msra.mxu0 0.0
  %1601 = vmatprep.subr.mxu0 0.0
  %1602 = vmatpush1.msra.mxu0 0.0
  %1603 = vmatprep.subr.mxu0 0.0
  %1604 = vmatpush1.msra.mxu0 0.0
  %1605 = vmatprep.subr.mxu0 0.0
  %1606 = vmatpush1.msra.mxu0 0.0
  %1607 = vmatprep.subr.mxu0 0.0
  %1608 = vmatpush1.msra.mxu0 0.0
  %1609 = vmatprep.subr.mxu0 0.0
  %1610 = vmatpush1.msra.mxu0 0.0
  %1611 = vmatprep.subr.mxu0 0.0
  %1612 = vmatpush1.msra.mxu0 0.0
  %1613 = vmatprep.subr.mxu0 0.0
  %1614 = vmatpush1.msra.mxu0 0.0
  %1615 = vmatprep.subr.mxu0 0.0
  %1616 = vmatpush1.msra.mxu0 0.0
  %1617 = vmatprep.subr.mxu0 0.0
  %1618 = vmatpush1.msra.mxu0 0.0
  %1619 = vmatprep.subr.mxu0 0.0
  %1620 = vmatpush1.msra.mxu0 0.0
  %1621 = vmatprep.subr.mxu0 0.0
  %1622 = vmatpush1.msra.mxu0 0.0
  %1623 = vmatprep.subr.mxu0 0.0
  %1624 = vmatpush1.msra.mxu0 0.0
  %1625 = vmatprep.mubr.f32.mxu0 0.0
  %1626 = vmatmul.mubr.f32.gmra.mrb[0].mxu0 %v1557
  %v1627 = vpop.f32.mrb[0].mxu0
  %v1628 = vadd.f32 0.0, %v1627
  %v1629 = vpop.f32.mrb[0].mxu0
  %v1630 = vadd.f32 0.0, %v1629
  %1631 = vdwg.mxu0
  %1632 = vmatprep.subr.mxu0 0.0
  %1633 = vmatpush1.msra.mxu0 %v343
  %1634 = vmatprep.subr.mxu0 0.0
  %1635 = vmatpush1.msra.mxu0 %v346
  %1636 = vmatprep.subr.mxu0 0.0
  %1637 = vmatpush1.msra.mxu0 %v349
  %1638 = vmatprep.subr.mxu0 0.0
  %1639 = vmatpush1.msra.mxu0 %v352
  %1640 = vmatprep.subr.mxu0 0.0
  %1641 = vmatpush1.msra.mxu0 %v355
  %1642 = vmatprep.subr.mxu0 0.0
  %1643 = vmatpush1.msra.mxu0 %v358
  %1644 = vmatprep.subr.mxu0 0.0
  %1645 = vmatpush1.msra.mxu0 %v361
  %1646 = vmatprep.subr.mxu0 0.0
  %1647 = vmatpush1.msra.mxu0 %v364
  %1648 = vmatprep.subr.mxu0 0.0
  %1649 = vmatpush1.msra.mxu0 %v367
  %1650 = vmatprep.subr.mxu0 0.0
  %1651 = vmatpush1.msra.mxu0 %v370
  %1652 = vmatprep.subr.mxu0 0.0
  %1653 = vmatpush1.msra.mxu0 %v373
  %1654 = vmatprep.subr.mxu0 0.0
  %1655 = vmatpush1.msra.mxu0 %v376
  %1656 = vmatprep.subr.mxu0 0.0
  %1657 = vmatpush1.msra.mxu0 %v379
  %1658 = vmatprep.subr.mxu0 0.0
  %1659 = vmatpush1.msra.mxu0 %v382
  %1660 = vmatprep.subr.mxu0 0.0
  %1661 = vmatpush1.msra.mxu0 %v385
  %1662 = vmatprep.subr.mxu0 0.0
  %1663 = vmatpush1.msra.mxu0 %v388
  %1664 = vmatprep.subr.mxu0 0.0
  %1665 = vmatpush1.msra.mxu0 0.0
  %1666 = vmatprep.subr.mxu0 0.0
  %1667 = vmatpush1.msra.mxu0 0.0
  %1668 = vmatprep.subr.mxu0 0.0
  %1669 = vmatpush1.msra.mxu0 0.0
  %1670 = vmatprep.subr.mxu0 0.0
  %1671 = vmatpush1.msra.mxu0 0.0
  %1672 = vmatprep.subr.mxu0 0.0
  %1673 = vmatpush1.msra.mxu0 0.0
  %1674 = vmatprep.subr.mxu0 0.0
  %1675 = vmatpush1.msra.mxu0 0.0
  %1676 = vmatprep.subr.mxu0 0.0
  %1677 = vmatpush1.msra.mxu0 0.0
  %1678 = vmatprep.subr.mxu0 0.0
  %1679 = vmatpush1.msra.mxu0 0.0
  %1680 = vmatprep.subr.mxu0 0.0
  %1681 = vmatpush1.msra.mxu0 0.0
  %1682 = vmatprep.subr.mxu0 0.0
  %1683 = vmatpush1.msra.mxu0 0.0
  %1684 = vmatprep.subr.mxu0 0.0
  %1685 = vmatpush1.msra.mxu0 0.0
  %1686 = vmatprep.subr.mxu0 0.0
  %1687 = vmatpush1.msra.mxu0 0.0
  %1688 = vmatprep.subr.mxu0 0.0
  %1689 = vmatpush1.msra.mxu0 0.0
  %1690 = vmatprep.subr.mxu0 0.0
  %1691 = vmatpush1.msra.mxu0 0.0
  %1692 = vmatprep.subr.mxu0 0.0
  %1693 = vmatpush1.msra.mxu0 0.0
  %1694 = vmatprep.subr.mxu0 0.0
  %1695 = vmatpush1.msra.mxu0 0.0
  %1696 = vmatprep.mubr.f32.mxu0 0.0
  %1697 = vmatmul.mubr.f32.gmra.mrb[0].mxu0 %v1557
  %v1698 = vpop.f32.mrb[0].mxu0
  %v1699 = vadd.f32 0.0, %v1698
  %v1700 = vpop.f32.mrb[0].mxu0
  %1701 = vdwg.mxu0
  %v1702 = vadd.f32 %v1558, %v1628
  %v1703 = vxor.u32 %v1702, 2147483648
  %v1704 = vmul.f32 %v1703, 1.442695
  %v1705 = vpow.pop %v1704
  %v1706 = vadd.f32 %v1705, 1.0
  %v1707 = vrcp.pop %v1706
  %v1708 = vmul.f32 1.0, %v1707
  %v1709 = vadd.f32 %v1559, %v1630
  %v1710 = vxor.u32 %v1709, 2147483648
  %v1711 = vmul.f32 %v1710, 1.442695
  %v1712 = vpow.pop %v1711
  %v1713 = vadd.f32 %v1712, 1.0
  %v1714 = vrcp.pop %v1713
  %v1715 = vmul.f32 1.0, %v1714
  %v1716 = vadd.f32 %v1699, %v394
  %v1717 = vmul.f32 %v1708, %v1716
  %v1718 = vadd.f32 %v1560, %v1717
  %v1719 = vtanh.pop %v1718
  %v1720 = vsub.f32 1.0, %v1715
  %v1721 = vmul.f32 %v1720, %v1719
  %v1722 = vmul.f32 %v1715, %v1557
  %v1723 = vadd.f32 %v1721, %v1722
  %v1724 = vld [vmem:[%s5] sm:$0xff]
  %v1725 = vld [vmem:[%s5 + $0x8] sm:$0xff]
  %v1726 = vld [vmem:[%s5 + $0x10] sm:$0xff]
  %v1727 = vld [vmem:[%s5 + $0x18] sm:$0xff]
  %v1728 = vld [vmem:[%s5 + $0x20] sm:$0xff]
  %v1729 = vld [vmem:[%s5 + $0x28] sm:$0xff]
  %v1730 = vld [vmem:[%s5 + $0x30] sm:$0xff]
  %v1731 = vld [vmem:[%s5 + $0x38] sm:$0xff]
  %v1732 = vld [vmem:[%s5 + $0x40] sm:$0xff]
  %v1733 = vld [vmem:[%s5 + $0x48] sm:$0xff]
  %v1734 = vld [vmem:[%s5 + $0x50] sm:$0xff]
  %v1735 = vld [vmem:[%s5 + $0x58] sm:$0xff]
  %v1736 = vld [vmem:[%s5 + $0x60] sm:$0xff]
  %v1737 = vld [vmem:[%s5 + $0x68] sm:$0xff]
  %v1738 = vld [vmem:[%s5 + $0x70] sm:$0xff]
  %v1739 = vld [vmem:[%s5 + $0x78] sm:$0xff]
  %v1740 = vld [vmem:[%s6] sm:$0x1]
  %v1742 = vlaneseq
  %v1743 = vshrl.u32 %v1742, 7
  %v1744 = vsub.s32 0, %v1743
  %v1745 = vrot.slane %v1740, %v1744
  %1747 = vmatprep.subr.mxu0 0.0
  %1748 = vmatpush1.msra.mxu0 %v1724
  %1749 = vmatprep.subr.mxu0 0.0
  %1750 = vmatpush1.msra.mxu0 %v1725
  %1751 = vmatprep.subr.mxu0 0.0
  %1752 = vmatpush1.msra.mxu0 %v1726
  %1753 = vmatprep.subr.mxu0 0.0
  %1754 = vmatpush1.msra.mxu0 %v1727
  %1755 = vmatprep.subr.mxu0 0.0
  %1756 = vmatpush1.msra.mxu0 %v1728
  %1757 = vmatprep.subr.mxu0 0.0
  %1758 = vmatpush1.msra.mxu0 %v1729
  %1759 = vmatprep.subr.mxu0 0.0
  %1760 = vmatpush1.msra.mxu0 %v1730
  %1761 = vmatprep.subr.mxu0 0.0
  %1762 = vmatpush1.msra.mxu0 %v1731
  %1763 = vmatprep.subr.mxu0 0.0
  %1764 = vmatpush1.msra.mxu0 %v1732
  %1765 = vmatprep.subr.mxu0 0.0
  %1766 = vmatpush1.msra.mxu0 %v1733
  %1767 = vmatprep.subr.mxu0 0.0
  %1768 = vmatpush1.msra.mxu0 %v1734
  %1769 = vmatprep.subr.mxu0 0.0
  %1770 = vmatpush1.msra.mxu0 %v1735
  %1771 = vmatprep.subr.mxu0 0.0
  %1772 = vmatpush1.msra.mxu0 %v1736
  %1773 = vmatprep.subr.mxu0 0.0
  %1774 = vmatpush1.msra.mxu0 %v1737
  %1775 = vmatprep.subr.mxu0 0.0
  %1776 = vmatpush1.msra.mxu0 %v1738
  %1777 = vmatprep.subr.mxu0 0.0
  %1778 = vmatpush1.msra.mxu0 %v1739
  %1779 = vmatprep.subr.mxu0 0.0
  %1780 = vmatpush1.msra.mxu0 0.0
  %1781 = vmatprep.subr.mxu0 0.0
  %1782 = vmatpush1.msra.mxu0 0.0
  %1783 = vmatprep.subr.mxu0 0.0
  %1784 = vmatpush1.msra.mxu0 0.0
  %1785 = vmatprep.subr.mxu0 0.0
  %1786 = vmatpush1.msra.mxu0 0.0
  %1787 = vmatprep.subr.mxu0 0.0
  %1788 = vmatpush1.msra.mxu0 0.0
  %1789 = vmatprep.subr.mxu0 0.0
  %1790 = vmatpush1.msra.mxu0 0.0
  %1791 = vmatprep.subr.mxu0 0.0
  %1792 = vmatpush1.msra.mxu0 0.0
  %1793 = vmatprep.subr.mxu0 0.0
  %1794 = vmatpush1.msra.mxu0 0.0
  %1795 = vmatprep.subr.mxu0 0.0
  %1796 = vmatpush1.msra.mxu0 0.0
  %1797 = vmatprep.subr.mxu0 0.0
  %1798 = vmatpush1.msra.mxu0 0.0
  %1799 = vmatprep.subr.mxu0 0.0
  %1800 = vmatpush1.msra.mxu0 0.0
  %1801 = vmatprep.subr.mxu0 0.0
  %1802 = vmatpush1.msra.mxu0 0.0
  %1803 = vmatprep.subr.mxu0 0.0
  %1804 = vmatpush1.msra.mxu0 0.0
  %1805 = vmatprep.subr.mxu0 0.0
  %1806 = vmatpush1.msra.mxu0 0.0
  %1807 = vmatprep.subr.mxu0 0.0
  %1808 = vmatpush1.msra.mxu0 0.0
  %1809 = vmatprep.subr.mxu0 0.0
  %1810 = vmatpush1.msra.mxu0 0.0
  %1811 = vmatprep.mubr.f32.mxu0 0.0
  %1812 = vmatmul.mubr.f32.gmra.mrb[0].mxu0 %v1723
  %v1813 = vpop.f32.mrb[0].mxu0
  %v1814 = vadd.f32 %v1745, %v1813
  %v1815 = vpop.f32.mrb[0].mxu0
  %1816 = vdwg.mxu0
  %v1817 = vxor.u32 %v1814, 2147483648
  %v1818 = vmul.f32 %v1817, 1.442695
  %v1819 = vpow.pop %v1818
  %v1820 = vadd.f32 %v1819, 1.0
  %v1821 = vrcp.pop %v1820
  %v1822 = vmul.f32 1.0, %v1821
  %v1823 = vlaneseq
  %v1824 = vand.u32 %v1823, 127
  %vm1825 = vcmp.lt.s32.totalorder %v1824, 2
  %v1826 = vsel %vm1825, %v1822, 0.0
  %1827 = vst [vmem:[%s7] sm:$0xff] %v1826
  // Predicated region
  $region30: #{gru_forward.1} parent=0 // pred_check
    _
  $region31: #{gru_forward.1} parent=0 // pred_check_branch
    %1829 = sbr.rel (0) target = $region33
  $region32: #{gru_forward.1} parent=0 // pred_region
    _
  $region33: #{gru_forward.1} parent=0 // pred_fallthru
    _
  // Predicated region
  $region34: #{gru_forward.1} parent=0 // pred_check
    _
  $region35: #{gru_forward.1} parent=0 // pred_check_branch
    %1831 = sbr.rel (0) target = $region37
  $region36: #{gru_forward.1} parent=0 // pred_region
    _
  $region37: #{gru_forward.1} parent=0 // pred_fallthru
    _

</llo_original>
